<compile_context>
chip_gen: v7x
topology: tpu7x:2x2x1
jax: 0.10.0
libtpu: 0.0.40
codegen_flags: <defaults>
</compile_context>

<pallas_src>
import jax
import jax.numpy as jnp
from jax.experimental import pallas as pl
from jax.experimental.pallas import tpu as pltpu

INPUT_LEN = 40
DIMS = [INPUT_LEN, 256, 128, 64, 32, 1]   # fc1..fc5


def _round_up(x, m):
    return (x + m - 1) // m * m


def fcn_kernel(x_ref,
               w1_ref, b1_ref,
               w2_ref, b2_ref,
               w3_ref, b3_ref,
               w4_ref, b4_ref,
               w5_ref, b5_ref,
               o_ref):
    """Whole 5-layer MLP for one batch tile, feature-major.

    x_ref:  (INPUT_LEN, bt) bf16 (batch on lanes, lane-dense)
    wi_ref: (out_i, in_i)   bf16 (transposed weights, VMEM-resident)
    bi_ref: (out_i, 1)      f32  (lane-broadcast bias)
    o_ref:  (1, bt)         f32  (lane-dense row writeback)
    """

    def layer(h_bf16, w_ref, b_ref):
        # MXU matmul in bf16 with f32 accumulation; bias-add stays f32 on VPU.
        acc = jnp.dot(w_ref[...], h_bf16, preferred_element_type=jnp.float32)
        return acc + b_ref[...]

    h = x_ref[...]                                                        # (40,  bt) bf16
    h = jnp.maximum(layer(h, w1_ref, b1_ref), 0.0).astype(jnp.bfloat16)   # (256, bt)
    h = jnp.maximum(layer(h, w2_ref, b2_ref), 0.0).astype(jnp.bfloat16)   # (128, bt)
    h = jnp.maximum(layer(h, w3_ref, b3_ref), 0.0).astype(jnp.bfloat16)   # (64,  bt)
    h = jnp.maximum(layer(h, w4_ref, b4_ref), 0.0).astype(jnp.bfloat16)   # (32,  bt)
    out = layer(h, w5_ref, b5_ref)                                        # (1,   bt) f32
    o_ref[...] = out.astype(o_ref.dtype)


def fcn_forward(x, params, *, batch_tile=256):
    """x: [B, INPUT_LEN] float32. params: list of (W[in, out], b[1, out]) float32."""
    B, F = x.shape
    assert F == INPUT_LEN

    bt = batch_tile
    B_pad = max(_round_up(B, bt), bt)

    # Pad the batch (ragged sizes OK), transpose to feature-major, cast to bf16.
    x_t = jnp.zeros((F, B_pad), jnp.bfloat16).at[:, :B].set(x.T.astype(jnp.bfloat16))

    flat_params = []
    in_specs = [pl.BlockSpec((F, bt), lambda i: (0, i))]
    for (w, b) in params:
        w_t = w.T.astype(jnp.bfloat16)    # (out, in) bf16 matmul operand
        b_c = b.T.astype(jnp.float32)     # (out, 1)  f32 bias
        flat_params += [w_t, b_c]
        in_specs += [
            pl.BlockSpec(w_t.shape, lambda i: (0, 0)),   # full weight, VMEM-resident
            pl.BlockSpec(b_c.shape, lambda i: (0, 0)),   # full bias,   VMEM-resident
        ]

    out_spec = pl.BlockSpec((1, bt), lambda i: (0, i))   # lane-dense output row

    flops = 2 * B_pad * sum(i * o for i, o in zip(DIMS[:-1], DIMS[1:]))
    bytes_accessed = (x_t.size * 2
                      + sum(w.size * 2 + b.size * 4 for (w, b) in params)
                      + B_pad * 4)
    cost = pl.CostEstimate(flops=flops, transcendentals=0,
                           bytes_accessed=bytes_accessed)

    out_row = pl.pallas_call(
        fcn_kernel,
        out_shape=jax.ShapeDtypeStruct((1, B_pad), jnp.float32),
        grid_spec=pltpu.PrefetchScalarGridSpec(
            num_scalar_prefetch=0,
            grid=(B_pad // bt,),
            in_specs=in_specs,
            out_specs=out_spec,
        ),
        compiler_params=pltpu.CompilerParams(
            dimension_semantics=("parallel",)),   # shards batch tiles across v7x TCs
        cost_estimate=cost,
    )(x_t, *flat_params)

    return out_row[0, :B].reshape(B, 1)


def init_params(key):
    """Deterministic init mimicking torch.nn.Linear default (U[-1/sqrt(in), 1/sqrt(in)])."""
    params = []
    for li in range(len(DIMS) - 1):
        fan_in, fan_out = DIMS[li], DIMS[li + 1]
        key, kw, kb = jax.random.split(key, 3)
        bound = 1.0 / jnp.sqrt(jnp.float32(fan_in))
        w = jax.random.uniform(kw, (fan_in, fan_out), jnp.float32, -bound, bound)
        b = jax.random.uniform(kb, (1, fan_out), jnp.float32, -bound, bound)
        params.append((w, b))
    return params


def fcn_reference(x, params):
    """Pure-JAX f32 reference matching the PyTorch module semantics."""
    h = x
    for i, (w, b) in enumerate(params):
        h = h @ w + b
        if i < len(params) - 1:
            h = jnp.maximum(h, 0.0)
    return h


if __name__ == "__main__":
    key = jax.random.PRNGKey(0)
    kp, kx = jax.random.split(key)

    params = init_params(kp)

    # Ragged batch (not a multiple of the tile) to exercise the padding path;
    # x.view(x.size(0), -1) from the torch module is a no-op for flat inputs.
    B = 300
    x = jax.random.normal(kx, (B, INPUT_LEN), jnp.float32)

    out = fcn_forward(x, params, batch_tile=256)
    out = jax.block_until_ready(out)

    ref = fcn_reference(x, params)
    assert out.shape == (B, 1)
    # bf16 matmul operands (f32 accumulation) -> loosened tolerance vs f32 reference.
    max_err = float(jnp.max(jnp.abs(out - ref)))
    assert jnp.allclose(out, ref, atol=1e-1, rtol=1e-1), (
        "mismatch vs reference, max abs err = %g" % max_err)

    print("KERNEL_OK")
</pallas_src>

<mosaic_0001>
module attributes {stable_mosaic.version = 11 : i64} {
  func.func @fcn_kernel(%arg0: i32, %arg1: memref<40x256xbf16, #tpu.memory_space<vmem>>, %arg2: memref<256x40xbf16, #tpu.memory_space<vmem>>, %arg3: memref<256x1xf32, #tpu.memory_space<vmem>>, %arg4: memref<128x256xbf16, #tpu.memory_space<vmem>>, %arg5: memref<128x1xf32, #tpu.memory_space<vmem>>, %arg6: memref<64x128xbf16, #tpu.memory_space<vmem>>, %arg7: memref<64x1xf32, #tpu.memory_space<vmem>>, %arg8: memref<32x64xbf16, #tpu.memory_space<vmem>>, %arg9: memref<32x1xf32, #tpu.memory_space<vmem>>, %arg10: memref<1x32xbf16, #tpu.memory_space<vmem>>, %arg11: memref<1x1xf32, #tpu.memory_space<vmem>>, %arg12: memref<1x256xf32, #tpu.memory_space<vmem>>) attributes {dimension_semantics = [#tpu.dimension_semantics<parallel>], iteration_bounds = array<i64: 2>, scalar_prefetch = 0 : i64, scratch_operands = 0 : i64, tpu.core_type = #tpu.core_type<tc>, window_params = [{transform_indices = @transform_0, window_bounds = array<i64: 40, 256>}, {pipeline_mode = #tpu.pipeline_mode<synchronous>, transform_indices = @transform_1, window_bounds = array<i64: 256, 40>}, {pipeline_mode = #tpu.pipeline_mode<synchronous>, transform_indices = @transform_2, window_bounds = array<i64: 256, 1>}, {pipeline_mode = #tpu.pipeline_mode<synchronous>, transform_indices = @transform_3, window_bounds = array<i64: 128, 256>}, {pipeline_mode = #tpu.pipeline_mode<synchronous>, transform_indices = @transform_4, window_bounds = array<i64: 128, 1>}, {pipeline_mode = #tpu.pipeline_mode<synchronous>, transform_indices = @transform_5, window_bounds = array<i64: 64, 128>}, {pipeline_mode = #tpu.pipeline_mode<synchronous>, transform_indices = @transform_6, window_bounds = array<i64: 64, 1>}, {pipeline_mode = #tpu.pipeline_mode<synchronous>, transform_indices = @transform_7, window_bounds = array<i64: 32, 64>}, {pipeline_mode = #tpu.pipeline_mode<synchronous>, transform_indices = @transform_8, window_bounds = array<i64: 32, 1>}, {pipeline_mode = #tpu.pipeline_mode<synchronous>, transform_indices = @transform_9, window_bounds = array<i64: 1, 32>}, {pipeline_mode = #tpu.pipeline_mode<synchronous>, transform_indices = @transform_10, window_bounds = array<i64: 1, 1>}, {transform_indices = @transform_11, window_bounds = array<i64: 1, 256>}]} {
    %c0 = arith.constant 0 : index
    %c0_0 = arith.constant 0 : index
    %0 = vector.load %arg1[%c0, %c0_0] : memref<40x256xbf16, #tpu.memory_space<vmem>>, vector<40x256xbf16>
    %c0_1 = arith.constant 0 : index
    %c0_2 = arith.constant 0 : index
    %1 = vector.load %arg2[%c0_1, %c0_2] : memref<256x40xbf16, #tpu.memory_space<vmem>>, vector<256x40xbf16>
    %cst = arith.constant dense<0.000000e+00> : vector<256x256xf32>
    %2 = tpu.matmul %1, %0, %cst {dimension_numbers = #tpu.dot_dimension_numbers<[1], [0], [0], [1], [0, 0, 1, 1], [], []>} : vector<256x40xbf16>, vector<40x256xbf16>, vector<256x256xf32> -> vector<256x256xf32>
    %c0_3 = arith.constant 0 : index
    %c0_4 = arith.constant 0 : index
    %3 = vector.load %arg3[%c0_3, %c0_4] : memref<256x1xf32, #tpu.memory_space<vmem>>, vector<256x1xf32>
    %4 = vector.broadcast %3 : vector<256x1xf32> to vector<256x256xf32>
    %5 = arith.addf %2, %4 : vector<256x256xf32>
    %cst_5 = arith.constant 0.000000e+00 : f32
    %6 = vector.broadcast %cst_5 : f32 to vector<256x256xf32>
    %7 = arith.maximumf %5, %6 : vector<256x256xf32>
    %8 = arith.truncf %7 : vector<256x256xf32> to vector<256x256xbf16>
    %c0_6 = arith.constant 0 : index
    %c0_7 = arith.constant 0 : index
    %9 = vector.load %arg4[%c0_6, %c0_7] : memref<128x256xbf16, #tpu.memory_space<vmem>>, vector<128x256xbf16>
    %cst_8 = arith.constant dense<0.000000e+00> : vector<128x256xf32>
    %10 = tpu.matmul %9, %8, %cst_8 {dimension_numbers = #tpu.dot_dimension_numbers<[1], [0], [0], [1], [0, 0, 1, 1], [], []>} : vector<128x256xbf16>, vector<256x256xbf16>, vector<128x256xf32> -> vector<128x256xf32>
    %c0_9 = arith.constant 0 : index
    %c0_10 = arith.constant 0 : index
    %11 = vector.load %arg5[%c0_9, %c0_10] : memref<128x1xf32, #tpu.memory_space<vmem>>, vector<128x1xf32>
    %12 = vector.broadcast %11 : vector<128x1xf32> to vector<128x256xf32>
    %13 = arith.addf %10, %12 : vector<128x256xf32>
    %cst_11 = arith.constant 0.000000e+00 : f32
    %14 = vector.broadcast %cst_11 : f32 to vector<128x256xf32>
    %15 = arith.maximumf %13, %14 : vector<128x256xf32>
    %16 = arith.truncf %15 : vector<128x256xf32> to vector<128x256xbf16>
    %c0_12 = arith.constant 0 : index
    %c0_13 = arith.constant 0 : index
    %17 = vector.load %arg6[%c0_12, %c0_13] : memref<64x128xbf16, #tpu.memory_space<vmem>>, vector<64x128xbf16>
    %cst_14 = arith.constant dense<0.000000e+00> : vector<64x256xf32>
    %18 = tpu.matmul %17, %16, %cst_14 {dimension_numbers = #tpu.dot_dimension_numbers<[1], [0], [0], [1], [0, 0, 1, 1], [], []>} : vector<64x128xbf16>, vector<128x256xbf16>, vector<64x256xf32> -> vector<64x256xf32>
    %c0_15 = arith.constant 0 : index
    %c0_16 = arith.constant 0 : index
    %19 = vector.load %arg7[%c0_15, %c0_16] : memref<64x1xf32, #tpu.memory_space<vmem>>, vector<64x1xf32>
    %20 = vector.broadcast %19 : vector<64x1xf32> to vector<64x256xf32>
    %21 = arith.addf %18, %20 : vector<64x256xf32>
    %cst_17 = arith.constant 0.000000e+00 : f32
    %22 = vector.broadcast %cst_17 : f32 to vector<64x256xf32>
    %23 = arith.maximumf %21, %22 : vector<64x256xf32>
    %24 = arith.truncf %23 : vector<64x256xf32> to vector<64x256xbf16>
    %c0_18 = arith.constant 0 : index
    %c0_19 = arith.constant 0 : index
    %25 = vector.load %arg8[%c0_18, %c0_19] : memref<32x64xbf16, #tpu.memory_space<vmem>>, vector<32x64xbf16>
    %cst_20 = arith.constant dense<0.000000e+00> : vector<32x256xf32>
    %26 = tpu.matmul %25, %24, %cst_20 {dimension_numbers = #tpu.dot_dimension_numbers<[1], [0], [0], [1], [0, 0, 1, 1], [], []>} : vector<32x64xbf16>, vector<64x256xbf16>, vector<32x256xf32> -> vector<32x256xf32>
    %c0_21 = arith.constant 0 : index
    %c0_22 = arith.constant 0 : index
    %27 = vector.load %arg9[%c0_21, %c0_22] : memref<32x1xf32, #tpu.memory_space<vmem>>, vector<32x1xf32>
    %28 = vector.broadcast %27 : vector<32x1xf32> to vector<32x256xf32>
    %29 = arith.addf %26, %28 : vector<32x256xf32>
    %cst_23 = arith.constant 0.000000e+00 : f32
    %30 = vector.broadcast %cst_23 : f32 to vector<32x256xf32>
    %31 = arith.maximumf %29, %30 : vector<32x256xf32>
    %32 = arith.truncf %31 : vector<32x256xf32> to vector<32x256xbf16>
    %c0_24 = arith.constant 0 : index
    %c0_25 = arith.constant 0 : index
    %33 = vector.load %arg10[%c0_24, %c0_25] : memref<1x32xbf16, #tpu.memory_space<vmem>>, vector<1x32xbf16>
    %cst_26 = arith.constant dense<0.000000e+00> : vector<1x256xf32>
    %34 = tpu.matmul %33, %32, %cst_26 {dimension_numbers = #tpu.dot_dimension_numbers<[1], [0], [0], [1], [0, 0, 1, 1], [], []>} : vector<1x32xbf16>, vector<32x256xbf16>, vector<1x256xf32> -> vector<1x256xf32>
    %c0_27 = arith.constant 0 : index
    %c0_28 = arith.constant 0 : index
    %35 = vector.load %arg11[%c0_27, %c0_28] : memref<1x1xf32, #tpu.memory_space<vmem>>, vector<1x1xf32>
    %36 = vector.broadcast %35 : vector<1x1xf32> to vector<1x256xf32>
    %37 = arith.addf %34, %36 : vector<1x256xf32>
    %c0_29 = arith.constant 0 : index
    %c0_30 = arith.constant 0 : index
    %38 = vector.load %arg12[%c0_29, %c0_30] : memref<1x256xf32, #tpu.memory_space<vmem>>, vector<1x256xf32>
    tpu.vector_store %arg12[%c0_29, %c0_30], %37 {strides = array<i32>} : memref<1x256xf32, #tpu.memory_space<vmem>>, vector<1x256xf32>,
    return
  }
  func.func @transform_0(%arg0: i32) -> (i32, i32) {
    %c0_i32 = arith.constant 0 : i32
    %c0_i32_0 = arith.constant 0 : i32
    return %c0_i32, %arg0 : i32, i32
  }
  func.func @transform_1(%arg0: i32) -> (i32, i32) {
    %c0_i32 = arith.constant 0 : i32
    %c0_i32_0 = arith.constant 0 : i32
    %c0_i32_1 = arith.constant 0 : i32
    return %c0_i32, %c0_i32_0 : i32, i32
  }
  func.func @transform_2(%arg0: i32) -> (i32, i32) {
    %c0_i32 = arith.constant 0 : i32
    %c0_i32_0 = arith.constant 0 : i32
    %c0_i32_1 = arith.constant 0 : i32
    return %c0_i32, %c0_i32_0 : i32, i32
  }
  func.func @transform_3(%arg0: i32) -> (i32, i32) {
    %c0_i32 = arith.constant 0 : i32
    %c0_i32_0 = arith.constant 0 : i32
    %c0_i32_1 = arith.constant 0 : i32
    return %c0_i32, %c0_i32_0 : i32, i32
  }
  func.func @transform_4(%arg0: i32) -> (i32, i32) {
    %c0_i32 = arith.constant 0 : i32
    %c0_i32_0 = arith.constant 0 : i32
    %c0_i32_1 = arith.constant 0 : i32
    return %c0_i32, %c0_i32_0 : i32, i32
  }
  func.func @transform_5(%arg0: i32) -> (i32, i32) {
    %c0_i32 = arith.constant 0 : i32
    %c0_i32_0 = arith.constant 0 : i32
    %c0_i32_1 = arith.constant 0 : i32
    return %c0_i32, %c0_i32_0 : i32, i32
  }
  func.func @transform_6(%arg0: i32) -> (i32, i32) {
    %c0_i32 = arith.constant 0 : i32
    %c0_i32_0 = arith.constant 0 : i32
    %c0_i32_1 = arith.constant 0 : i32
    return %c0_i32, %c0_i32_0 : i32, i32
  }
  func.func @transform_7(%arg0: i32) -> (i32, i32) {
    %c0_i32 = arith.constant 0 : i32
    %c0_i32_0 = arith.constant 0 : i32
    %c0_i32_1 = arith.constant 0 : i32
    return %c0_i32, %c0_i32_0 : i32, i32
  }
  func.func @transform_8(%arg0: i32) -> (i32, i32) {
    %c0_i32 = arith.constant 0 : i32
    %c0_i32_0 = arith.constant 0 : i32
    %c0_i32_1 = arith.constant 0 : i32
    return %c0_i32, %c0_i32_0 : i32, i32
  }
  func.func @transform_9(%arg0: i32) -> (i32, i32) {
    %c0_i32 = arith.constant 0 : i32
    %c0_i32_0 = arith.constant 0 : i32
    %c0_i32_1 = arith.constant 0 : i32
    return %c0_i32, %c0_i32_0 : i32, i32
  }
  func.func @transform_10(%arg0: i32) -> (i32, i32) {
    %c0_i32 = arith.constant 0 : i32
    %c0_i32_0 = arith.constant 0 : i32
    %c0_i32_1 = arith.constant 0 : i32
    return %c0_i32, %c0_i32_0 : i32, i32
  }
  func.func @transform_11(%arg0: i32) -> (i32, i32) {
    %c0_i32 = arith.constant 0 : i32
    %c0_i32_0 = arith.constant 0 : i32
    return %c0_i32, %arg0 : i32, i32
  }
}

</mosaic_0001>

<llo_original>
// kernel: tpu_custom_call.1
$region0: #{tpu_custom_call.1}
  #allocation0 [shape = 'u32[]', space=smem, size = 0x4, offset = 0x4, fixed_abs, tag = 'smem constant byte address 0x4 - core index']
  #allocation1 [shape = 'u32[144,128]{1,0:T(1,128)}', space=vmem, size = 0x12000, scoped, tag = 'internal scratch']
  #allocation2 [shape = 'f32[1,1]{1,0:T(1,128)S(1)}', space=vmem, size = 0x200, scoped, tag = 'scoped memory for tpu_custom_call.1']
  %s0 = inlined_call_operand.vmem [shape: bf16[40,512], index: 0, kind: input, shape index: {}]
  %s1 = inlined_call_operand.vmem [shape: bf16[256,40], index: 1, kind: input, shape index: {}]
  %s2 = inlined_call_operand.vmem [shape: f32[256,1], index: 2, kind: input, shape index: {}]
  %s3 = inlined_call_operand.vmem [shape: bf16[128,256], index: 3, kind: input, shape index: {}]
  %s4 = inlined_call_operand.vmem [shape: f32[128,1], index: 4, kind: input, shape index: {}]
  %s5 = inlined_call_operand.vmem [shape: bf16[64,128], index: 5, kind: input, shape index: {}]
  %s6 = inlined_call_operand.vmem [shape: f32[64,1], index: 6, kind: input, shape index: {}]
  %s7 = inlined_call_operand.vmem [shape: bf16[32,64], index: 7, kind: input, shape index: {}]
  %s8 = inlined_call_operand.vmem [shape: f32[32,1], index: 8, kind: input, shape index: {}]
  %s9 = inlined_call_operand.vmem [shape: bf16[1,32], index: 9, kind: input, shape index: {}]
  %s10 = inlined_call_operand.<no memory space> [shape: f32[1,1], index: 10, kind: input, shape index: {}]
  %s11 = inlined_call_operand.hbm [shape: f32[1,512], index: 11, kind: output, shape index: {}]
  %s12 = sld [smem:[#allocation0]]
  $region115: #{tpu_custom_call.1} parent=0
    _
  %s14 = ssub.s32 1, %s12
  %s15 = scalar_select 0, %s14, %s12
  %v16 = vstv %s10
  %17 = vst [vmem:[#allocation2] sm:$0x1] %v16
  $region1: #{tpu_custom_call.1} parent=0
    #allocation3 [shape = 'u8[40960]{0}', space=vmem, size = 0xa000, scoped, tag = 'input window, operand 0']
    #allocation4 [shape = 'u8[2048]{0}', space=vmem, size = 0x800, scoped, tag = 'output window, operand 0']
    #allocation5 [shape = 's32[2]{0}', space=sflag, size = 0x8, scoped, tag = 'scoped memory for tpu_custom_call.1']
    %18 = vsyncpa [#allocation5], 0
    %s19 = scalar_lea.sflag [#allocation5], 1
    %20 = vsyncpa %s19, 0
    loop: start=0, step=1, limit=4
    $region2: #{tpu_custom_call.1} parent=1 // loop_pre_header
      _
    $region3: #{tpu_custom_call.1} parent=1 // loop_header
      %s22 = sphi 0, %s26
      %p23 = scmp.ge.s32.totalorder %s22, 4
      %s32 = sphi 0, %s34
      %s35 = sphi 0, %s32
      %s36 = sphi 0, %s35
      %s52 = sphi 0, %s36
      %s56 = sphi 0, %s56
      %s58 = sphi 0, %s56
      %s59 = sphi 0, %s58
      %s73 = sphi 0, %s59
      %s77 = sphi 0, %s77
      %s79 = sphi 0, %s77
      %s80 = sphi 0, %s79
      %s94 = sphi 0, %s80
      %s98 = sphi 0, %s98
      %s100 = sphi 0, %s98
      %s101 = sphi 0, %s100
      %s115 = sphi 0, %s101
      %s119 = sphi 0, %s119
      %s121 = sphi 0, %s119
      %s122 = sphi 0, %s121
      %s136 = sphi 0, %s122
      %s140 = sphi 0, %s140
      %s142 = sphi 0, %s140
      %s143 = sphi 0, %s142
      %s157 = sphi 0, %s143
      %s161 = sphi 0, %s161
      %s163 = sphi 0, %s161
      %s164 = sphi 0, %s163
      %s178 = sphi 0, %s164
      %s182 = sphi 0, %s182
      %s184 = sphi 0, %s182
      %s185 = sphi 0, %s184
      %s199 = sphi 0, %s185
      %s203 = sphi 0, %s203
      %s205 = sphi 0, %s203
      %s206 = sphi 0, %s205
      %s220 = sphi 0, %s206
      %s224 = sphi 0, %s224
      %s226 = sphi 0, %s224
      %s227 = sphi 0, %s226
      %s241 = sphi 0, %s227
      %s245 = sphi 0, %s245
      %s247 = sphi 0, %s245
      %s248 = sphi 0, %s247
      %s262 = sphi 0, %s248
      %s268 = sphi 0, %s270
      %s271 = sphi 0, %s268
      %s272 = sphi 0, %s271
      %s288 = sphi 0, %s272
    $region4: #{tpu_custom_call.1} parent=1 // loop_header_branch
      %25 = sbr.rel (%p23) target = $region8
    $region5: #{tpu_custom_call.1} parent=1 // loop_body
      %s27 = ssub.s32 %s22, 1
      %s28 = ssub.s32 %s22, 2
      %s29 = sadd.s32 %s22, 1
      %s30 = ssub.s32 %s22, %s29
      %p31 = scmp.eq.s32.totalorder %s30, 0
      %s33 = sadd.s32 %s32, 1
      %s34 = scalar_select %p31, %s32, %s33
      %p37 = pneg %p31
      %p38 = scmp.eq.s32.totalorder %s22, 1
      %p39 = por %p37, %p38
      %p40 = scmp.ne.s32.totalorder %s32, %s35
      %p41 = scmp.eq.s32.totalorder %s22, 0
      %p42 = por %p40, %p41
      %p43 = scmp.ne.s32.totalorder %s32, %s35
      %p44 = scmp.eq.s32.totalorder %s27, 1
      %p45 = por %p43, %p44
      %p46 = scmp.ne.s32.totalorder %s35, %s36
      %p47 = scmp.eq.s32.totalorder %s27, 0
      %p48 = por %p46, %p47
      %p49 = scmp.ne.s32.totalorder %s35, %s36
      %p50 = scmp.eq.s32.totalorder %s28, 1
      %p51 = por %p49, %p50
      %p53 = scmp.ne.s32.totalorder %s36, %s52
      %p54 = scmp.eq.s32.totalorder %s28, 0
      %p55 = por %p53, %p54
      %s57 = sadd.s32 %s56, 1
      %p60 = scmp.eq.s32.totalorder %s22, 1
      %p61 = scmp.ne.s32.totalorder %s56, %s58
      %p62 = scmp.eq.s32.totalorder %s22, 0
      %p63 = por %p61, %p62
      %p64 = scmp.ne.s32.totalorder %s56, %s58
      %p65 = scmp.eq.s32.totalorder %s27, 1
      %p66 = por %p64, %p65
      %p67 = scmp.ne.s32.totalorder %s58, %s59
      %p68 = scmp.eq.s32.totalorder %s27, 0
      %p69 = por %p67, %p68
      %p70 = scmp.ne.s32.totalorder %s58, %s59
      %p71 = scmp.eq.s32.totalorder %s28, 1
      %p72 = por %p70, %p71
      %p74 = scmp.ne.s32.totalorder %s59, %s73
      %p75 = scmp.eq.s32.totalorder %s28, 0
      %p76 = por %p74, %p75
      %s78 = sadd.s32 %s77, 1
      %p81 = scmp.eq.s32.totalorder %s22, 1
      %p82 = scmp.ne.s32.totalorder %s77, %s79
      %p83 = scmp.eq.s32.totalorder %s22, 0
      %p84 = por %p82, %p83
      %p85 = scmp.ne.s32.totalorder %s77, %s79
      %p86 = scmp.eq.s32.totalorder %s27, 1
      %p87 = por %p85, %p86
      %p88 = scmp.ne.s32.totalorder %s79, %s80
      %p89 = scmp.eq.s32.totalorder %s27, 0
      %p90 = por %p88, %p89
      %p91 = scmp.ne.s32.totalorder %s79, %s80
      %p92 = scmp.eq.s32.totalorder %s28, 1
      %p93 = por %p91, %p92
      %p95 = scmp.ne.s32.totalorder %s80, %s94
      %p96 = scmp.eq.s32.totalorder %s28, 0
      %p97 = por %p95, %p96
      %s99 = sadd.s32 %s98, 1
      %p102 = scmp.eq.s32.totalorder %s22, 1
      %p103 = scmp.ne.s32.totalorder %s98, %s100
      %p104 = scmp.eq.s32.totalorder %s22, 0
      %p105 = por %p103, %p104
      %p106 = scmp.ne.s32.totalorder %s98, %s100
      %p107 = scmp.eq.s32.totalorder %s27, 1
      %p108 = por %p106, %p107
      %p109 = scmp.ne.s32.totalorder %s100, %s101
      %p110 = scmp.eq.s32.totalorder %s27, 0
      %p111 = por %p109, %p110
      %p112 = scmp.ne.s32.totalorder %s100, %s101
      %p113 = scmp.eq.s32.totalorder %s28, 1
      %p114 = por %p112, %p113
      %p116 = scmp.ne.s32.totalorder %s101, %s115
      %p117 = scmp.eq.s32.totalorder %s28, 0
      %p118 = por %p116, %p117
      %s120 = sadd.s32 %s119, 1
      %p123 = scmp.eq.s32.totalorder %s22, 1
      %p124 = scmp.ne.s32.totalorder %s119, %s121
      %p125 = scmp.eq.s32.totalorder %s22, 0
      %p126 = por %p124, %p125
      %p127 = scmp.ne.s32.totalorder %s119, %s121
      %p128 = scmp.eq.s32.totalorder %s27, 1
      %p129 = por %p127, %p128
      %p130 = scmp.ne.s32.totalorder %s121, %s122
      %p131 = scmp.eq.s32.totalorder %s27, 0
      %p132 = por %p130, %p131
      %p133 = scmp.ne.s32.totalorder %s121, %s122
      %p134 = scmp.eq.s32.totalorder %s28, 1
      %p135 = por %p133, %p134
      %p137 = scmp.ne.s32.totalorder %s122, %s136
      %p138 = scmp.eq.s32.totalorder %s28, 0
      %p139 = por %p137, %p138
      %s141 = sadd.s32 %s140, 1
      %p144 = scmp.eq.s32.totalorder %s22, 1
      %p145 = scmp.ne.s32.totalorder %s140, %s142
      %p146 = scmp.eq.s32.totalorder %s22, 0
      %p147 = por %p145, %p146
      %p148 = scmp.ne.s32.totalorder %s140, %s142
      %p149 = scmp.eq.s32.totalorder %s27, 1
      %p150 = por %p148, %p149
      %p151 = scmp.ne.s32.totalorder %s142, %s143
      %p152 = scmp.eq.s32.totalorder %s27, 0
      %p153 = por %p151, %p152
      %p154 = scmp.ne.s32.totalorder %s142, %s143
      %p155 = scmp.eq.s32.totalorder %s28, 1
      %p156 = por %p154, %p155
      %p158 = scmp.ne.s32.totalorder %s143, %s157
      %p159 = scmp.eq.s32.totalorder %s28, 0
      %p160 = por %p158, %p159
      %s162 = sadd.s32 %s161, 1
      %p165 = scmp.eq.s32.totalorder %s22, 1
      %p166 = scmp.ne.s32.totalorder %s161, %s163
      %p167 = scmp.eq.s32.totalorder %s22, 0
      %p168 = por %p166, %p167
      %p169 = scmp.ne.s32.totalorder %s161, %s163
      %p170 = scmp.eq.s32.totalorder %s27, 1
      %p171 = por %p169, %p170
      %p172 = scmp.ne.s32.totalorder %s163, %s164
      %p173 = scmp.eq.s32.totalorder %s27, 0
      %p174 = por %p172, %p173
      %p175 = scmp.ne.s32.totalorder %s163, %s164
      %p176 = scmp.eq.s32.totalorder %s28, 1
      %p177 = por %p175, %p176
      %p179 = scmp.ne.s32.totalorder %s164, %s178
      %p180 = scmp.eq.s32.totalorder %s28, 0
      %p181 = por %p179, %p180
      %s183 = sadd.s32 %s182, 1
      %p186 = scmp.eq.s32.totalorder %s22, 1
      %p187 = scmp.ne.s32.totalorder %s182, %s184
      %p188 = scmp.eq.s32.totalorder %s22, 0
      %p189 = por %p187, %p188
      %p190 = scmp.ne.s32.totalorder %s182, %s184
      %p191 = scmp.eq.s32.totalorder %s27, 1
      %p192 = por %p190, %p191
      %p193 = scmp.ne.s32.totalorder %s184, %s185
      %p194 = scmp.eq.s32.totalorder %s27, 0
      %p195 = por %p193, %p194
      %p196 = scmp.ne.s32.totalorder %s184, %s185
      %p197 = scmp.eq.s32.totalorder %s28, 1
      %p198 = por %p196, %p197
      %p200 = scmp.ne.s32.totalorder %s185, %s199
      %p201 = scmp.eq.s32.totalorder %s28, 0
      %p202 = por %p200, %p201
      %s204 = sadd.s32 %s203, 1
      %p207 = scmp.eq.s32.totalorder %s22, 1
      %p208 = scmp.ne.s32.totalorder %s203, %s205
      %p209 = scmp.eq.s32.totalorder %s22, 0
      %p210 = por %p208, %p209
      %p211 = scmp.ne.s32.totalorder %s203, %s205
      %p212 = scmp.eq.s32.totalorder %s27, 1
      %p213 = por %p211, %p212
      %p214 = scmp.ne.s32.totalorder %s205, %s206
      %p215 = scmp.eq.s32.totalorder %s27, 0
      %p216 = por %p214, %p215
      %p217 = scmp.ne.s32.totalorder %s205, %s206
      %p218 = scmp.eq.s32.totalorder %s28, 1
      %p219 = por %p217, %p218
      %p221 = scmp.ne.s32.totalorder %s206, %s220
      %p222 = scmp.eq.s32.totalorder %s28, 0
      %p223 = por %p221, %p222
      %s225 = sadd.s32 %s224, 1
      %p228 = scmp.eq.s32.totalorder %s22, 1
      %p229 = scmp.ne.s32.totalorder %s224, %s226
      %p230 = scmp.eq.s32.totalorder %s22, 0
      %p231 = por %p229, %p230
      %p232 = scmp.ne.s32.totalorder %s224, %s226
      %p233 = scmp.eq.s32.totalorder %s27, 1
      %p234 = por %p232, %p233
      %p235 = scmp.ne.s32.totalorder %s226, %s227
      %p236 = scmp.eq.s32.totalorder %s27, 0
      %p237 = por %p235, %p236
      %p238 = scmp.ne.s32.totalorder %s226, %s227
      %p239 = scmp.eq.s32.totalorder %s28, 1
      %p240 = por %p238, %p239
      %p242 = scmp.ne.s32.totalorder %s227, %s241
      %p243 = scmp.eq.s32.totalorder %s28, 0
      %p244 = por %p242, %p243
      %s246 = sadd.s32 %s245, 1
      %p249 = scmp.eq.s32.totalorder %s22, 1
      %p250 = scmp.ne.s32.totalorder %s245, %s247
      %p251 = scmp.eq.s32.totalorder %s22, 0
      %p252 = por %p250, %p251
      %p253 = scmp.ne.s32.totalorder %s245, %s247
      %p254 = scmp.eq.s32.totalorder %s27, 1
      %p255 = por %p253, %p254
      %p256 = scmp.ne.s32.totalorder %s247, %s248
      %p257 = scmp.eq.s32.totalorder %s27, 0
      %p258 = por %p256, %p257
      %p259 = scmp.ne.s32.totalorder %s247, %s248
      %p260 = scmp.eq.s32.totalorder %s28, 1
      %p261 = por %p259, %p260
      %p263 = scmp.ne.s32.totalorder %s248, %s262
      %p264 = scmp.eq.s32.totalorder %s28, 0
      %p265 = por %p263, %p264
      %s266 = ssub.s32 %s22, %s29
      %p267 = scmp.eq.s32.totalorder %s266, 0
      %s269 = sadd.s32 %s268, 1
      %s270 = scalar_select %p267, %s268, %s269
      %p273 = pneg %p267
      %p274 = scmp.eq.s32.totalorder %s22, 1
      %p275 = por %p273, %p274
      %p276 = scmp.ne.s32.totalorder %s268, %s271
      %p277 = scmp.eq.s32.totalorder %s22, 0
      %p278 = por %p276, %p277
      %p279 = scmp.ne.s32.totalorder %s268, %s271
      %p280 = scmp.eq.s32.totalorder %s27, 1
      %p281 = por %p279, %p280
      %p282 = scmp.ne.s32.totalorder %s271, %s272
      %p283 = scmp.eq.s32.totalorder %s27, 0
      %p284 = por %p282, %p283
      %p285 = scmp.ne.s32.totalorder %s271, %s272
      %p286 = scmp.eq.s32.totalorder %s28, 1
      %p287 = por %p285, %p286
      %p289 = scmp.ne.s32.totalorder %s272, %s288
      %p290 = scmp.eq.s32.totalorder %s28, 0
      %p291 = por %p289, %p290
      %p292 = scmp.le.s32.totalorder 1, %s22
      %p293 = scmp.lt.s32.totalorder %s22, 3
      %p294 = pnand %p292, %p293
      %p295 = pneg %p294
      // Predicated region
      $region9: #{tpu_custom_call.1} parent=5 // pred_check
        _
      $region10: #{tpu_custom_call.1} parent=5 // pred_check_branch
        %297 = sbr.rel (%p294) target = $region12
      $region11: #{tpu_custom_call.1} parent=5 // pred_region
        %s298 = ssub.s32 %s22, 1
        // Predicated region
        $region13: #{tpu_custom_call.1} parent=11 // pred_check
          %p299 = pneg %p69
        $region14: #{tpu_custom_call.1} parent=11 // pred_check_branch
          %301 = sbr.rel (%p299) target = $region16
        $region15: #{tpu_custom_call.1} parent=11 // pred_region
          _
        $region16: #{tpu_custom_call.1} parent=11 // pred_fallthru
          _
        // Predicated region
        $region17: #{tpu_custom_call.1} parent=11 // pred_check
          %p302 = pneg %p90
        $region18: #{tpu_custom_call.1} parent=11 // pred_check_branch
          %304 = sbr.rel (%p302) target = $region20
        $region19: #{tpu_custom_call.1} parent=11 // pred_region
          _
        $region20: #{tpu_custom_call.1} parent=11 // pred_fallthru
          _
        // Predicated region
        $region21: #{tpu_custom_call.1} parent=11 // pred_check
          %p305 = pneg %p111
        $region22: #{tpu_custom_call.1} parent=11 // pred_check_branch
          %307 = sbr.rel (%p305) target = $region24
        $region23: #{tpu_custom_call.1} parent=11 // pred_region
          _
        $region24: #{tpu_custom_call.1} parent=11 // pred_fallthru
          _
        // Predicated region
        $region25: #{tpu_custom_call.1} parent=11 // pred_check
          %p308 = pneg %p132
        $region26: #{tpu_custom_call.1} parent=11 // pred_check_branch
          %310 = sbr.rel (%p308) target = $region28
        $region27: #{tpu_custom_call.1} parent=11 // pred_region
          _
        $region28: #{tpu_custom_call.1} parent=11 // pred_fallthru
          _
        // Predicated region
        $region29: #{tpu_custom_call.1} parent=11 // pred_check
          %p311 = pneg %p153
        $region30: #{tpu_custom_call.1} parent=11 // pred_check_branch
          %313 = sbr.rel (%p311) target = $region32
        $region31: #{tpu_custom_call.1} parent=11 // pred_region
          _
        $region32: #{tpu_custom_call.1} parent=11 // pred_fallthru
          _
        // Predicated region
        $region33: #{tpu_custom_call.1} parent=11 // pred_check
          %p314 = pneg %p174
        $region34: #{tpu_custom_call.1} parent=11 // pred_check_branch
          %316 = sbr.rel (%p314) target = $region36
        $region35: #{tpu_custom_call.1} parent=11 // pred_region
          _
        $region36: #{tpu_custom_call.1} parent=11 // pred_fallthru
          _
        // Predicated region
        $region37: #{tpu_custom_call.1} parent=11 // pred_check
          %p317 = pneg %p195
        $region38: #{tpu_custom_call.1} parent=11 // pred_check_branch
          %319 = sbr.rel (%p317) target = $region40
        $region39: #{tpu_custom_call.1} parent=11 // pred_region
          _
        $region40: #{tpu_custom_call.1} parent=11 // pred_fallthru
          _
        // Predicated region
        $region41: #{tpu_custom_call.1} parent=11 // pred_check
          %p320 = pneg %p216
        $region42: #{tpu_custom_call.1} parent=11 // pred_check_branch
          %322 = sbr.rel (%p320) target = $region44
        $region43: #{tpu_custom_call.1} parent=11 // pred_region
          _
        $region44: #{tpu_custom_call.1} parent=11 // pred_fallthru
          _
        // Predicated region
        $region45: #{tpu_custom_call.1} parent=11 // pred_check
          %p323 = pneg %p237
        $region46: #{tpu_custom_call.1} parent=11 // pred_check_branch
          %325 = sbr.rel (%p323) target = $region48
        $region47: #{tpu_custom_call.1} parent=11 // pred_region
          _
        $region48: #{tpu_custom_call.1} parent=11 // pred_fallthru
          _
        // Predicated region
        $region49: #{tpu_custom_call.1} parent=11 // pred_check
          %p326 = pneg %p258
        $region50: #{tpu_custom_call.1} parent=11 // pred_check_branch
          %328 = sbr.rel (%p326) target = $region52
        $region51: #{tpu_custom_call.1} parent=11 // pred_region
          _
        $region52: #{tpu_custom_call.1} parent=11 // pred_fallthru
          _
      $region12: #{tpu_custom_call.1} parent=5 // pred_fallthru
        _
      %p329 = scmp.lt.s32.totalorder %s22, 2
      // Predicated region
      $region53: #{tpu_custom_call.1} parent=5 // pred_check
        %p330 = pneg %p329
      $region54: #{tpu_custom_call.1} parent=5 // pred_check_branch
        %332 = sbr.rel (%p330) target = $region56
      $region55: #{tpu_custom_call.1} parent=5 // pred_region
        // Predicated region
        $region57: #{tpu_custom_call.1} parent=55 // pred_check
          %p333 = pneg %p42
        $region58: #{tpu_custom_call.1} parent=55 // pred_check_branch
          %335 = sbr.rel (%p333) target = $region60
        $region59: #{tpu_custom_call.1} parent=55 // pred_region
          %s336 = sand.u32 %s32, 1
          %s337 = sand.u32 %s32, 1
          %s338 = smul.addr %s337, 40
          %s339 = scalar_lea.vmem [#allocation3], %s338
          %s340 = smul.u32 2, %s22
          %s341 = smul.addr %s340, 4
          %s342 = scalar_lea.vmem %s0, %s341
          // Predicated region
          $region61: #{tpu_custom_call.1} parent=59 // pred_check
            _
          $region62: #{tpu_custom_call.1} parent=59 // pred_check_branch
            %344 = sbr.rel (0) target = $region64
          $region63: #{tpu_custom_call.1} parent=59 // pred_region
            // Predicated region
            $region65: #{tpu_custom_call.1} parent=63 // pred_check
              _
            $region66: #{tpu_custom_call.1} parent=63 // pred_check_branch
              %346 = sbr.rel (0) target = $region68
            $region67: #{tpu_custom_call.1} parent=63 // pred_region
              // Predicated region
              $region80: #{tpu_custom_call.1} parent=67 // pred_check
                _
              $region81: #{tpu_custom_call.1} parent=67 // pred_check_branch
                %369 = sbr.rel (0) target = $region83
              $region82: #{tpu_custom_call.1} parent=67 // pred_region
                loop: start=0, step=1, limit=1
                $region84: #{tpu_custom_call.1} parent=82 // loop_pre_header
                  _
                $region85: #{tpu_custom_call.1} parent=82 // loop_header
                  %s371 = sphi 0, %s375
                  %p372 = scmp.ge.s32.totalorder %s371, 1
                  %s376 = sphi %s342, %s342
                  %s377 = sphi %s339, %s339
                $region86: #{tpu_custom_call.1} parent=82 // loop_header_branch
                  %374 = sbr.rel (%p372) target = $region90
                $region87: #{tpu_custom_call.1} parent=82 // loop_body
                  %v378 = vld [vmem:[%s376] sm:$0xff]
                  %379 = vst [vmem:[%s377] sm:$0xff] %v378
                  %v380 = vld [vmem:[%s376 + $0x10] sm:$0xff]
                  %381 = vst [vmem:[%s377 + $0x8] sm:$0xff] %v380
                  %v382 = vld [vmem:[%s376 + $0x20] sm:$0xff]
                  %383 = vst [vmem:[%s377 + $0x10] sm:$0xff] %v382
                  %v384 = vld [vmem:[%s376 + $0x30] sm:$0xff]
                  %385 = vst [vmem:[%s377 + $0x18] sm:$0xff] %v384
                  %v386 = vld [vmem:[%s376 + $0x40] sm:$0xff]
                  %387 = vst [vmem:[%s377 + $0x20] sm:$0xff] %v386
                $region88: #{tpu_custom_call.1} parent=82 // loop_footer
                  %s375 = sadd.s32 1, %s371
                $region89: #{tpu_custom_call.1} parent=82 // loop_footer_branch
                  %370 = sbr.rel target = $region85
                $region90: #{tpu_custom_call.1} parent=82 // loop_exit
                  _
              $region83: #{tpu_custom_call.1} parent=67 // pred_fallthru
                _
              // Predicated region
              $region91: #{tpu_custom_call.1} parent=67 // pred_check
                _
              $region92: #{tpu_custom_call.1} parent=67 // pred_check_branch
                %389 = sbr.rel target = $region94
              $region93: #{tpu_custom_call.1} parent=67 // pred_region
                _
              $region94: #{tpu_custom_call.1} parent=67 // pred_fallthru
                _
            $region68: #{tpu_custom_call.1} parent=63 // pred_fallthru
              _
            // Predicated region
            $region69: #{tpu_custom_call.1} parent=63 // pred_check
              _
            $region70: #{tpu_custom_call.1} parent=63 // pred_check_branch
              %348 = sbr.rel target = $region72
            $region71: #{tpu_custom_call.1} parent=63 // pred_region
              loop: start=0, step=1, limit=1
              $region73: #{tpu_custom_call.1} parent=71 // loop_pre_header
                _
              $region74: #{tpu_custom_call.1} parent=71 // loop_header
                %s351 = sphi 0, %s355
                %p352 = scmp.ge.s32.totalorder %s351, 1
                %s356 = sphi %s342, %s342
                %s357 = sphi %s339, %s339
              $region75: #{tpu_custom_call.1} parent=71 // loop_header_branch
                %354 = sbr.rel (%p352) target = $region79
              $region76: #{tpu_custom_call.1} parent=71 // loop_body
                %v358 = vld [vmem:[%s356] sm:$0xff]
                %359 = vst [vmem:[%s357] sm:$0xff] %v358
                %v360 = vld [vmem:[%s356 + $0x10] sm:$0xff]
                %361 = vst [vmem:[%s357 + $0x8] sm:$0xff] %v360
                %v362 = vld [vmem:[%s356 + $0x20] sm:$0xff]
                %363 = vst [vmem:[%s357 + $0x10] sm:$0xff] %v362
                %v364 = vld [vmem:[%s356 + $0x30] sm:$0xff]
                %365 = vst [vmem:[%s357 + $0x18] sm:$0xff] %v364
                %v366 = vld [vmem:[%s356 + $0x40] sm:$0xff]
                %367 = vst [vmem:[%s357 + $0x20] sm:$0xff] %v366
              $region77: #{tpu_custom_call.1} parent=71 // loop_footer
                %s355 = sadd.s32 1, %s351
              $region78: #{tpu_custom_call.1} parent=71 // loop_footer_branch
                %350 = sbr.rel target = $region74
              $region79: #{tpu_custom_call.1} parent=71 // loop_exit
                _
            $region72: #{tpu_custom_call.1} parent=63 // pred_fallthru
              _
          $region64: #{tpu_custom_call.1} parent=59 // pred_fallthru
            _
          %390 = vnop
        $region60: #{tpu_custom_call.1} parent=55 // pred_fallthru
          _
      $region56: #{tpu_custom_call.1} parent=5 // pred_fallthru
        _
      %p391 = scmp.le.s32.totalorder 1, %s22
      %p392 = scmp.lt.s32.totalorder %s22, 3
      %p393 = pnand %p391, %p392
      %p394 = pneg %p393
      // Predicated region
      $region95: #{tpu_custom_call.1} parent=5 // pred_check
        _
      $region96: #{tpu_custom_call.1} parent=5 // pred_check_branch
        %396 = sbr.rel (%p393) target = $region98
      $region97: #{tpu_custom_call.1} parent=5 // pred_region
        %s397 = ssub.s32 %s22, 1
        %s398 = sand.u32 %s35, 1
        %s399 = sand.u32 %s35, 1
        %s400 = smul.addr %s399, 40
        %s401 = scalar_lea.vmem [#allocation3], %s400
        // Predicated region
        $region99: #{tpu_custom_call.1} parent=97 // pred_check
          %p402 = pneg %p48
        $region100: #{tpu_custom_call.1} parent=97 // pred_check_branch
          %404 = sbr.rel (%p402) target = $region102
        $region101: #{tpu_custom_call.1} parent=97 // pred_region
          _
        $region102: #{tpu_custom_call.1} parent=97 // pred_fallthru
          _
        %s405 = sand.u32 %s35, 1
        %s406 = sand.u32 %s35, 1
        %s407 = smul.addr %s406, 40
        %s408 = scalar_lea.vmem [#allocation3], %s407
        %p409 = pneg %p48
        %p410 = pneg %p45
        %p411 = pneg %p69
        %p412 = pneg %p66
        %p413 = pneg %p90
        %p414 = pneg %p87
        %p415 = pneg %p111
        %p416 = pneg %p108
        %p417 = pneg %p132
        %p418 = pneg %p129
        %p419 = pneg %p153
        %p420 = pneg %p150
        %p421 = pneg %p174
        %p422 = pneg %p171
        %p423 = pneg %p195
        %p424 = pneg %p192
        %p425 = pneg %p216
        %p426 = pneg %p213
        %p427 = pneg %p237
        %p428 = pneg %p234
        %p429 = pneg %p258
        %p430 = pneg %p255
        %p431 = pneg %p284
        %p432 = pneg %p281
        %s433 = sand.u32 %s271, 1
        %s434 = scalar_lea.sflag [#allocation5], %s433
        %s435 = sand.u32 %s271, 1
        %s436 = smul.addr %s435, 2
        %s437 = scalar_lea.vmem [#allocation4], %s436
        %s438 = smul.u32 2, %s27
        %s439 = smul.u32 2, %s27
        %v441 = vld [vmem:[%s401] sm:$0xff]
        %v442 = vld [vmem:[%s401 + $0x8] sm:$0xff]
        %v443 = vld [vmem:[%s401 + $0x10] sm:$0xff]
        %v444 = vld [vmem:[%s401 + $0x18] sm:$0xff]
        %v445 = vld [vmem:[%s401 + $0x20] sm:$0xff]
        %v446 = vld [vmem:[%s1] sm:$0xf]
        %v447 = vld [vmem:[%s1 + $0x4] sm:$0xf]
        %v448 = vld [vmem:[%s1 + $0x8] sm:$0xf]
        %v449 = vld [vmem:[%s1 + $0xc] sm:$0xf]
        %v450 = vld [vmem:[%s1 + $0x10] sm:$0xf]
        %v451 = vld [vmem:[%s1 + $0x14] sm:$0xf]
        %v452 = vld [vmem:[%s1 + $0x18] sm:$0xf]
        %v453 = vld [vmem:[%s1 + $0x1c] sm:$0xf]
        %v454 = vld [vmem:[%s1 + $0x20] sm:$0xf]
        %v455 = vld [vmem:[%s1 + $0x24] sm:$0xf]
        %v456 = vld [vmem:[%s1 + $0x28] sm:$0xf]
        %v457 = vld [vmem:[%s1 + $0x2c] sm:$0xf]
        %v458 = vld [vmem:[%s1 + $0x30] sm:$0xf]
        %v459 = vld [vmem:[%s1 + $0x34] sm:$0xf]
        %v460 = vld [vmem:[%s1 + $0x38] sm:$0xf]
        %v461 = vld [vmem:[%s1 + $0x3c] sm:$0xf]
        %v462 = vld [vmem:[%s1 + $0x40] sm:$0xf]
        %v463 = vld [vmem:[%s1 + $0x44] sm:$0xf]
        %v464 = vld [vmem:[%s1 + $0x48] sm:$0xf]
        %v465 = vld [vmem:[%s1 + $0x4c] sm:$0xf]
        %v466 = vld [vmem:[%s1 + $0x50] sm:$0xf]
        %v467 = vld [vmem:[%s1 + $0x54] sm:$0xf]
        %v468 = vld [vmem:[%s1 + $0x58] sm:$0xf]
        %v469 = vld [vmem:[%s1 + $0x5c] sm:$0xf]
        %v470 = vld [vmem:[%s1 + $0x60] sm:$0xf]
        %v471 = vld [vmem:[%s1 + $0x64] sm:$0xf]
        %v472 = vld [vmem:[%s1 + $0x68] sm:$0xf]
        %v473 = vld [vmem:[%s1 + $0x6c] sm:$0xf]
        %v474 = vld [vmem:[%s1 + $0x70] sm:$0xf]
        %v475 = vld [vmem:[%s1 + $0x74] sm:$0xf]
        %v476 = vld [vmem:[%s1 + $0x78] sm:$0xf]
        %v477 = vld [vmem:[%s1 + $0x7c] sm:$0xf]
        %v478 = vld [vmem:[%s2] sm:$0xff]
        %v479 = vld [vmem:[%s2 + $0x8] sm:$0xff]
        %v480 = vld [vmem:[%s2 + $0x10] sm:$0xff]
        %v481 = vld [vmem:[%s2 + $0x18] sm:$0xff]
        %v482 = vld [vmem:[%s2 + $0x20] sm:$0xff]
        %v483 = vld [vmem:[%s2 + $0x28] sm:$0xff]
        %v484 = vld [vmem:[%s2 + $0x30] sm:$0xff]
        %v485 = vld [vmem:[%s2 + $0x38] sm:$0xff]
        %v486 = vld [vmem:[%s2 + $0x40] sm:$0xff]
        %v487 = vld [vmem:[%s2 + $0x48] sm:$0xff]
        %v488 = vld [vmem:[%s2 + $0x50] sm:$0xff]
        %v489 = vld [vmem:[%s2 + $0x58] sm:$0xff]
        %v490 = vld [vmem:[%s2 + $0x60] sm:$0xff]
        %v491 = vld [vmem:[%s2 + $0x68] sm:$0xff]
        %v492 = vld [vmem:[%s2 + $0x70] sm:$0xff]
        %v493 = vld [vmem:[%s2 + $0x78] sm:$0xff]
        %v494 = vld [vmem:[%s2 + $0x80] sm:$0xff]
        %v495 = vld [vmem:[%s2 + $0x88] sm:$0xff]
        %v496 = vld [vmem:[%s2 + $0x90] sm:$0xff]
        %v497 = vld [vmem:[%s2 + $0x98] sm:$0xff]
        %v498 = vld [vmem:[%s2 + $0xa0] sm:$0xff]
        %v499 = vld [vmem:[%s2 + $0xa8] sm:$0xff]
        %v500 = vld [vmem:[%s2 + $0xb0] sm:$0xff]
        %v501 = vld [vmem:[%s2 + $0xb8] sm:$0xff]
        %v502 = vld [vmem:[%s2 + $0xc0] sm:$0xff]
        %v503 = vld [vmem:[%s2 + $0xc8] sm:$0xff]
        %v504 = vld [vmem:[%s2 + $0xd0] sm:$0xff]
        %v505 = vld [vmem:[%s2 + $0xd8] sm:$0xff]
        %v506 = vld [vmem:[%s2 + $0xe0] sm:$0xff]
        %v507 = vld [vmem:[%s2 + $0xe8] sm:$0xff]
        %v508 = vld [vmem:[%s2 + $0xf0] sm:$0xff]
        %v509 = vld [vmem:[%s2 + $0xf8] sm:$0xff]
        %511 = vset.pattern.permute.xlu0 0
        %512 = vperm.xlu0 %511, %v478
        %v513 = vpop.permute.xlu0 %512
        %516 = vset.pattern.permute.xlu0 0
        %517 = vperm.xlu0 %516, %v479
        %v518 = vpop.permute.xlu0 %517
        %521 = vset.pattern.permute.xlu0 0
        %522 = vperm.xlu0 %521, %v480
        %v523 = vpop.permute.xlu0 %522
        %526 = vset.pattern.permute.xlu0 0
        %527 = vperm.xlu0 %526, %v481
        %v528 = vpop.permute.xlu0 %527
        %531 = vset.pattern.permute.xlu0 0
        %532 = vperm.xlu0 %531, %v482
        %v533 = vpop.permute.xlu0 %532
        %536 = vset.pattern.permute.xlu0 0
        %537 = vperm.xlu0 %536, %v483
        %v538 = vpop.permute.xlu0 %537
        %541 = vset.pattern.permute.xlu0 0
        %542 = vperm.xlu0 %541, %v484
        %v543 = vpop.permute.xlu0 %542
        %546 = vset.pattern.permute.xlu0 0
        %547 = vperm.xlu0 %546, %v485
        %v548 = vpop.permute.xlu0 %547
        %551 = vset.pattern.permute.xlu0 0
        %552 = vperm.xlu0 %551, %v486
        %v553 = vpop.permute.xlu0 %552
        %556 = vset.pattern.permute.xlu0 0
        %557 = vperm.xlu0 %556, %v487
        %v558 = vpop.permute.xlu0 %557
        %561 = vset.pattern.permute.xlu0 0
        %562 = vperm.xlu0 %561, %v488
        %v563 = vpop.permute.xlu0 %562
        %566 = vset.pattern.permute.xlu0 0
        %567 = vperm.xlu0 %566, %v489
        %v568 = vpop.permute.xlu0 %567
        %571 = vset.pattern.permute.xlu0 0
        %572 = vperm.xlu0 %571, %v490
        %v573 = vpop.permute.xlu0 %572
        %576 = vset.pattern.permute.xlu0 0
        %577 = vperm.xlu0 %576, %v491
        %v578 = vpop.permute.xlu0 %577
        %581 = vset.pattern.permute.xlu0 0
        %582 = vperm.xlu0 %581, %v492
        %v583 = vpop.permute.xlu0 %582
        %586 = vset.pattern.permute.xlu0 0
        %587 = vperm.xlu0 %586, %v493
        %v588 = vpop.permute.xlu0 %587
        %591 = vset.pattern.permute.xlu0 0
        %592 = vperm.xlu0 %591, %v494
        %v593 = vpop.permute.xlu0 %592
        %596 = vset.pattern.permute.xlu0 0
        %597 = vperm.xlu0 %596, %v495
        %v598 = vpop.permute.xlu0 %597
        %601 = vset.pattern.permute.xlu0 0
        %602 = vperm.xlu0 %601, %v496
        %v603 = vpop.permute.xlu0 %602
        %606 = vset.pattern.permute.xlu0 0
        %607 = vperm.xlu0 %606, %v497
        %v608 = vpop.permute.xlu0 %607
        %611 = vset.pattern.permute.xlu0 0
        %612 = vperm.xlu0 %611, %v498
        %v613 = vpop.permute.xlu0 %612
        %616 = vset.pattern.permute.xlu0 0
        %617 = vperm.xlu0 %616, %v499
        %v618 = vpop.permute.xlu0 %617
        %621 = vset.pattern.permute.xlu0 0
        %622 = vperm.xlu0 %621, %v500
        %v623 = vpop.permute.xlu0 %622
        %626 = vset.pattern.permute.xlu0 0
        %627 = vperm.xlu0 %626, %v501
        %v628 = vpop.permute.xlu0 %627
        %631 = vset.pattern.permute.xlu0 0
        %632 = vperm.xlu0 %631, %v502
        %v633 = vpop.permute.xlu0 %632
        %636 = vset.pattern.permute.xlu0 0
        %637 = vperm.xlu0 %636, %v503
        %v638 = vpop.permute.xlu0 %637
        %641 = vset.pattern.permute.xlu0 0
        %642 = vperm.xlu0 %641, %v504
        %v643 = vpop.permute.xlu0 %642
        %646 = vset.pattern.permute.xlu0 0
        %647 = vperm.xlu0 %646, %v505
        %v648 = vpop.permute.xlu0 %647
        %651 = vset.pattern.permute.xlu0 0
        %652 = vperm.xlu0 %651, %v506
        %v653 = vpop.permute.xlu0 %652
        %656 = vset.pattern.permute.xlu0 0
        %657 = vperm.xlu0 %656, %v507
        %v658 = vpop.permute.xlu0 %657
        %661 = vset.pattern.permute.xlu0 0
        %662 = vperm.xlu0 %661, %v508
        %v663 = vpop.permute.xlu0 %662
        %666 = vset.pattern.permute.xlu0 0
        %667 = vperm.xlu0 %666, %v509
        %v668 = vpop.permute.xlu0 %667
        %v702 = vunpack.c.l.b16 %v446
        %v703 = vunpack.c.l.b16 %v447
        %v704 = vunpack.c.l.b16 %v448
        %v705 = vunpack.c.l.b16 %v449
        %v706 = vunpack.c.l.b16 %v450
        %v707 = vunpack.c.l.b16 %v451
        %v708 = vunpack.c.l.b16 %v452
        %v709 = vunpack.c.l.b16 %v453
        %v710 = vunpack.c.l.b16 %v454
        %v711 = vunpack.c.l.b16 %v455
        %v712 = vunpack.c.l.b16 %v456
        %v713 = vunpack.c.l.b16 %v457
        %v714 = vunpack.c.l.b16 %v458
        %v715 = vunpack.c.l.b16 %v459
        %v716 = vunpack.c.l.b16 %v460
        %v717 = vunpack.c.l.b16 %v461
        %v718 = vunpack.c.l.b16 %v462
        %v719 = vunpack.c.l.b16 %v463
        %v720 = vunpack.c.l.b16 %v464
        %v721 = vunpack.c.l.b16 %v465
        %v722 = vunpack.c.l.b16 %v466
        %v723 = vunpack.c.l.b16 %v467
        %v724 = vunpack.c.l.b16 %v468
        %v725 = vunpack.c.l.b16 %v469
        %v726 = vunpack.c.l.b16 %v470
        %v727 = vunpack.c.l.b16 %v471
        %v728 = vunpack.c.l.b16 %v472
        %v729 = vunpack.c.l.b16 %v473
        %v730 = vunpack.c.l.b16 %v474
        %v731 = vunpack.c.l.b16 %v475
        %v732 = vunpack.c.l.b16 %v476
        %v733 = vunpack.c.l.b16 %v477
        %v734 = vpack.c.b16 %v703, %v702
        %v735 = vpack.c.b16 %v705, %v704
        %v736 = vpack.c.b16 %v707, %v706
        %v737 = vpack.c.b16 %v709, %v708
        %v738 = vpack.c.b16 %v711, %v710
        %v739 = vpack.c.b16 %v713, %v712
        %v740 = vpack.c.b16 %v715, %v714
        %v741 = vpack.c.b16 %v717, %v716
        %v742 = vpack.c.b16 %v719, %v718
        %v743 = vpack.c.b16 %v721, %v720
        %v744 = vpack.c.b16 %v723, %v722
        %v745 = vpack.c.b16 %v725, %v724
        %v746 = vpack.c.b16 %v727, %v726
        %v747 = vpack.c.b16 %v729, %v728
        %v748 = vpack.c.b16 %v731, %v730
        %v749 = vpack.c.b16 %v733, %v732
        %v755 = vunpack.c.l.b16 %v441
        %v756 = vunpack.c.h.b16 %v441
        %v757 = vunpack.c.l.b16 %v442
        %v758 = vunpack.c.h.b16 %v442
        %v759 = vunpack.c.l.b16 %v443
        %v760 = vunpack.c.h.b16 %v443
        %v761 = vunpack.c.l.b16 %v444
        %v762 = vunpack.c.h.b16 %v444
        %v763 = vunpack.c.l.b16 %v445
        %v764 = vunpack.c.h.b16 %v445
        %v765 = vpack.c.b16 %v757, %v755
        %v766 = vpack.c.b16 %v758, %v756
        %v767 = vpack.c.b16 %v761, %v759
        %v768 = vpack.c.b16 %v762, %v760
        %v769 = vpack.c.b16 %v763, %v763
        %v770 = vpack.c.b16 %v764, %v764
        %vm775 = vcmask 326656
        %v777 = vsel %vm775, %v734, 0
        %v780 = vsel %vm775, %v735, 0
        %v783 = vsel %vm775, %v736, 0
        %v786 = vsel %vm775, %v737, 0
        %v789 = vsel %vm775, %v738, 0
        %v792 = vsel %vm775, %v739, 0
        %v795 = vsel %vm775, %v740, 0
        %v798 = vsel %vm775, %v741, 0
        %v801 = vsel %vm775, %v742, 0
        %v804 = vsel %vm775, %v743, 0
        %v807 = vsel %vm775, %v744, 0
        %v810 = vsel %vm775, %v745, 0
        %v813 = vsel %vm775, %v746, 0
        %v816 = vsel %vm775, %v747, 0
        %v819 = vsel %vm775, %v748, 0
        %v822 = vsel %vm775, %v749, 0
        %vm824 = vcmask 1043456
        %v826 = vsel %vm824, %v769, 0
        %v829 = vsel %vm824, %v770, 0
        %831 = vmatprep.subr.bf16.mxu0 %v766
        %832 = vmatpush1.bf16.msra.mxu0 %v765
        %833 = vmatprep.subr.bf16.mxu0 %v768
        %834 = vmatpush1.bf16.msra.mxu0 %v767
        %835 = vmatprep.subr.bf16.mxu0 %v829
        %836 = vmatpush1.bf16.msra.mxu0 %v826
        %837 = vmatprep.subr.bf16.mxu0 0
        %838 = vmatpush1.bf16.msra.mxu0 0
        %839 = vmatprep.subr.bf16.mxu0 0
        %840 = vmatpush1.bf16.msra.mxu0 0
        %841 = vmatprep.subr.bf16.mxu0 0
        %842 = vmatpush1.bf16.msra.mxu0 0
        %843 = vmatprep.subr.bf16.mxu0 0
        %844 = vmatpush1.bf16.msra.mxu0 0
        %845 = vmatprep.subr.bf16.mxu0 0
        %846 = vmatpush1.bf16.msra.mxu0 0
        %847 = vmatprep.subr.bf16.mxu0 0
        %848 = vmatpush1.bf16.msra.mxu0 0
        %849 = vmatprep.subr.bf16.mxu0 0
        %850 = vmatpush1.bf16.msra.mxu0 0
        %851 = vmatprep.subr.bf16.mxu0 0
        %852 = vmatpush1.bf16.msra.mxu0 0
        %853 = vmatprep.subr.bf16.mxu0 0
        %854 = vmatpush1.bf16.msra.mxu0 0
        %855 = vmatprep.subr.bf16.mxu0 0
        %856 = vmatpush1.bf16.msra.mxu0 0
        %857 = vmatprep.subr.bf16.mxu0 0
        %858 = vmatpush1.bf16.msra.mxu0 0
        %859 = vmatprep.subr.bf16.mxu0 0
        %860 = vmatpush1.bf16.msra.mxu0 0
        %861 = vmatprep.subr.bf16.mxu0 0
        %862 = vmatpush1.bf16.msra.mxu0 0
        %863 = vmatprep.mubr.bf16.mxu0 0
        %864 = vmatmul.mubr.bf16.gmra.mrb[0].mxu0 %v777
        %v865 = vpop.f32.mrb[0].mxu0
        %v866 = vadd.f32 %v513, %v865
        %v867 = vpop.f32.mrb[0].mxu0
        %v868 = vadd.f32 %v513, %v867
        %v869 = vpop.f32.mrb[0].mxu0
        %v870 = vadd.f32 %v518, %v869
        %v871 = vpop.f32.mrb[0].mxu0
        %v872 = vadd.f32 %v518, %v871
        %873 = vmatprep.mubr.bf16.mxu0 0
        %874 = vmatmul.mubr.bf16.gmra.mrb[0].mxu0 %v780
        %v875 = vpop.f32.mrb[0].mxu0
        %v876 = vadd.f32 %v523, %v875
        %v877 = vpop.f32.mrb[0].mxu0
        %v878 = vadd.f32 %v523, %v877
        %v879 = vpop.f32.mrb[0].mxu0
        %v880 = vadd.f32 %v528, %v879
        %v881 = vpop.f32.mrb[0].mxu0
        %v882 = vadd.f32 %v528, %v881
        %883 = vmatprep.mubr.bf16.mxu0 0
        %884 = vmatmul.mubr.bf16.gmra.mrb[0].mxu0 %v783
        %v885 = vpop.f32.mrb[0].mxu0
        %v886 = vadd.f32 %v533, %v885
        %v887 = vpop.f32.mrb[0].mxu0
        %v888 = vadd.f32 %v533, %v887
        %v889 = vpop.f32.mrb[0].mxu0
        %v890 = vadd.f32 %v538, %v889
        %v891 = vpop.f32.mrb[0].mxu0
        %v892 = vadd.f32 %v538, %v891
        %893 = vmatprep.mubr.bf16.mxu0 0
        %894 = vmatmul.mubr.bf16.gmra.mrb[0].mxu0 %v786
        %v895 = vpop.f32.mrb[0].mxu0
        %v896 = vadd.f32 %v543, %v895
        %v897 = vpop.f32.mrb[0].mxu0
        %v898 = vadd.f32 %v543, %v897
        %v899 = vpop.f32.mrb[0].mxu0
        %v900 = vadd.f32 %v548, %v899
        %v901 = vpop.f32.mrb[0].mxu0
        %v902 = vadd.f32 %v548, %v901
        %903 = vmatprep.mubr.bf16.mxu0 0
        %904 = vmatmul.mubr.bf16.gmra.mrb[0].mxu0 %v789
        %v905 = vpop.f32.mrb[0].mxu0
        %v906 = vadd.f32 %v553, %v905
        %v907 = vpop.f32.mrb[0].mxu0
        %v908 = vadd.f32 %v553, %v907
        %v909 = vpop.f32.mrb[0].mxu0
        %v910 = vadd.f32 %v558, %v909
        %v911 = vpop.f32.mrb[0].mxu0
        %v912 = vadd.f32 %v558, %v911
        %913 = vmatprep.mubr.bf16.mxu0 0
        %914 = vmatmul.mubr.bf16.gmra.mrb[0].mxu0 %v792
        %v915 = vpop.f32.mrb[0].mxu0
        %v916 = vadd.f32 %v563, %v915
        %v917 = vpop.f32.mrb[0].mxu0
        %v918 = vadd.f32 %v563, %v917
        %v919 = vpop.f32.mrb[0].mxu0
        %v920 = vadd.f32 %v568, %v919
        %v921 = vpop.f32.mrb[0].mxu0
        %v922 = vadd.f32 %v568, %v921
        %923 = vmatprep.mubr.bf16.mxu0 0
        %924 = vmatmul.mubr.bf16.gmra.mrb[0].mxu0 %v795
        %v925 = vpop.f32.mrb[0].mxu0
        %v926 = vadd.f32 %v573, %v925
        %v927 = vpop.f32.mrb[0].mxu0
        %v928 = vadd.f32 %v573, %v927
        %v929 = vpop.f32.mrb[0].mxu0
        %v930 = vadd.f32 %v578, %v929
        %v931 = vpop.f32.mrb[0].mxu0
        %v932 = vadd.f32 %v578, %v931
        %933 = vmatprep.mubr.bf16.mxu0 0
        %934 = vmatmul.mubr.bf16.gmra.mrb[0].mxu0 %v798
        %v935 = vpop.f32.mrb[0].mxu0
        %v936 = vadd.f32 %v583, %v935
        %v937 = vpop.f32.mrb[0].mxu0
        %v938 = vadd.f32 %v583, %v937
        %v939 = vpop.f32.mrb[0].mxu0
        %v940 = vadd.f32 %v588, %v939
        %v941 = vpop.f32.mrb[0].mxu0
        %v942 = vadd.f32 %v588, %v941
        %943 = vmatprep.mubr.bf16.mxu0 0
        %944 = vmatmul.mubr.bf16.gmra.mrb[0].mxu0 %v801
        %v945 = vpop.f32.mrb[0].mxu0
        %v946 = vadd.f32 %v593, %v945
        %v947 = vpop.f32.mrb[0].mxu0
        %v948 = vadd.f32 %v593, %v947
        %v949 = vpop.f32.mrb[0].mxu0
        %v950 = vadd.f32 %v598, %v949
        %v951 = vpop.f32.mrb[0].mxu0
        %v952 = vadd.f32 %v598, %v951
        %953 = vmatprep.mubr.bf16.mxu0 0
        %954 = vmatmul.mubr.bf16.gmra.mrb[0].mxu0 %v804
        %v955 = vpop.f32.mrb[0].mxu0
        %v956 = vadd.f32 %v603, %v955
        %v957 = vpop.f32.mrb[0].mxu0
        %v958 = vadd.f32 %v603, %v957
        %v959 = vpop.f32.mrb[0].mxu0
        %v960 = vadd.f32 %v608, %v959
        %v961 = vpop.f32.mrb[0].mxu0
        %v962 = vadd.f32 %v608, %v961
        %963 = vmatprep.mubr.bf16.mxu0 0
        %964 = vmatmul.mubr.bf16.gmra.mrb[0].mxu0 %v807
        %v965 = vpop.f32.mrb[0].mxu0
        %v966 = vadd.f32 %v613, %v965
        %v967 = vpop.f32.mrb[0].mxu0
        %v968 = vadd.f32 %v613, %v967
        %v969 = vpop.f32.mrb[0].mxu0
        %v970 = vadd.f32 %v618, %v969
        %v971 = vpop.f32.mrb[0].mxu0
        %v972 = vadd.f32 %v618, %v971
        %973 = vmatprep.mubr.bf16.mxu0 0
        %974 = vmatmul.mubr.bf16.gmra.mrb[0].mxu0 %v810
        %v975 = vpop.f32.mrb[0].mxu0
        %v976 = vadd.f32 %v623, %v975
        %v977 = vpop.f32.mrb[0].mxu0
        %v978 = vadd.f32 %v623, %v977
        %v979 = vpop.f32.mrb[0].mxu0
        %v980 = vadd.f32 %v628, %v979
        %v981 = vpop.f32.mrb[0].mxu0
        %v982 = vadd.f32 %v628, %v981
        %983 = vmatprep.mubr.bf16.mxu0 0
        %984 = vmatmul.mubr.bf16.gmra.mrb[0].mxu0 %v813
        %v985 = vpop.f32.mrb[0].mxu0
        %v986 = vadd.f32 %v633, %v985
        %v987 = vpop.f32.mrb[0].mxu0
        %v988 = vadd.f32 %v633, %v987
        %v989 = vpop.f32.mrb[0].mxu0
        %v990 = vadd.f32 %v638, %v989
        %v991 = vpop.f32.mrb[0].mxu0
        %v992 = vadd.f32 %v638, %v991
        %993 = vmatprep.mubr.bf16.mxu0 0
        %994 = vmatmul.mubr.bf16.gmra.mrb[0].mxu0 %v816
        %v995 = vpop.f32.mrb[0].mxu0
        %v996 = vadd.f32 %v643, %v995
        %v997 = vpop.f32.mrb[0].mxu0
        %v998 = vadd.f32 %v643, %v997
        %v999 = vpop.f32.mrb[0].mxu0
        %v1000 = vadd.f32 %v648, %v999
        %v1001 = vpop.f32.mrb[0].mxu0
        %v1002 = vadd.f32 %v648, %v1001
        %1003 = vmatprep.mubr.bf16.mxu0 0
        %1004 = vmatmul.mubr.bf16.gmra.mrb[0].mxu0 %v819
        %v1005 = vpop.f32.mrb[0].mxu0
        %v1006 = vadd.f32 %v653, %v1005
        %v1007 = vpop.f32.mrb[0].mxu0
        %v1008 = vadd.f32 %v653, %v1007
        %v1009 = vpop.f32.mrb[0].mxu0
        %v1010 = vadd.f32 %v658, %v1009
        %v1011 = vpop.f32.mrb[0].mxu0
        %v1012 = vadd.f32 %v658, %v1011
        %1013 = vmatprep.mubr.bf16.mxu0 0
        %1014 = vmatmul.mubr.bf16.gmra.mrb[0].mxu0 %v822
        %v1015 = vpop.f32.mrb[0].mxu0
        %v1016 = vadd.f32 %v663, %v1015
        %v1017 = vpop.f32.mrb[0].mxu0
        %v1018 = vadd.f32 %v663, %v1017
        %v1019 = vpop.f32.mrb[0].mxu0
        %v1020 = vadd.f32 %v668, %v1019
        %v1021 = vpop.f32.mrb[0].mxu0
        %v1022 = vadd.f32 %v668, %v1021
        %1023 = vdwg.mxu0
        %v1024 = vmax.f32 %v866, 0.0
        %v1025 = vmax.f32 %v868, 0.0
        %v1026 = vmax.f32 %v870, 0.0
        %v1027 = vmax.f32 %v872, 0.0
        %v1028 = vmax.f32 %v876, 0.0
        %v1029 = vmax.f32 %v878, 0.0
        %v1030 = vmax.f32 %v880, 0.0
        %v1031 = vmax.f32 %v882, 0.0
        %v1032 = vmax.f32 %v886, 0.0
        %v1033 = vmax.f32 %v888, 0.0
        %v1034 = vmax.f32 %v890, 0.0
        %v1035 = vmax.f32 %v892, 0.0
        %v1036 = vmax.f32 %v896, 0.0
        %v1037 = vmax.f32 %v898, 0.0
        %v1038 = vmax.f32 %v900, 0.0
        %v1039 = vmax.f32 %v902, 0.0
        %v1040 = vmax.f32 %v906, 0.0
        %v1041 = vmax.f32 %v908, 0.0
        %v1042 = vmax.f32 %v910, 0.0
        %v1043 = vmax.f32 %v912, 0.0
        %v1044 = vmax.f32 %v916, 0.0
        %v1045 = vmax.f32 %v918, 0.0
        %v1046 = vmax.f32 %v920, 0.0
        %v1047 = vmax.f32 %v922, 0.0
        %v1048 = vmax.f32 %v926, 0.0
        %v1049 = vmax.f32 %v928, 0.0
        %v1050 = vmax.f32 %v930, 0.0
        %v1051 = vmax.f32 %v932, 0.0
        %v1052 = vmax.f32 %v936, 0.0
        %v1053 = vmax.f32 %v938, 0.0
        %v1054 = vmax.f32 %v940, 0.0
        %v1055 = vmax.f32 %v942, 0.0
        %v1056 = vmax.f32 %v946, 0.0
        %v1057 = vmax.f32 %v948, 0.0
        %v1058 = vmax.f32 %v950, 0.0
        %v1059 = vmax.f32 %v952, 0.0
        %v1060 = vmax.f32 %v956, 0.0
        %v1061 = vmax.f32 %v958, 0.0
        %v1062 = vmax.f32 %v960, 0.0
        %v1063 = vmax.f32 %v962, 0.0
        %v1064 = vmax.f32 %v966, 0.0
        %v1065 = vmax.f32 %v968, 0.0
        %v1066 = vmax.f32 %v970, 0.0
        %v1067 = vmax.f32 %v972, 0.0
        %v1068 = vmax.f32 %v976, 0.0
        %v1069 = vmax.f32 %v978, 0.0
        %v1070 = vmax.f32 %v980, 0.0
        %v1071 = vmax.f32 %v982, 0.0
        %v1072 = vmax.f32 %v986, 0.0
        %v1073 = vmax.f32 %v988, 0.0
        %v1074 = vmax.f32 %v990, 0.0
        %v1075 = vmax.f32 %v992, 0.0
        %v1076 = vmax.f32 %v996, 0.0
        %v1077 = vmax.f32 %v998, 0.0
        %v1078 = vmax.f32 %v1000, 0.0
        %v1079 = vmax.f32 %v1002, 0.0
        %v1080 = vmax.f32 %v1006, 0.0
        %v1081 = vmax.f32 %v1008, 0.0
        %v1082 = vmax.f32 %v1010, 0.0
        %v1083 = vmax.f32 %v1012, 0.0
        %v1084 = vmax.f32 %v1016, 0.0
        %v1085 = vmax.f32 %v1018, 0.0
        %v1086 = vmax.f32 %v1020, 0.0
        %v1087 = vmax.f32 %v1022, 0.0
        %v1088 = vpack.c.bf16 %v1026, %v1024
        %v1089 = vpack.c.bf16 %v1027, %v1025
        %v1090 = vpack.c.bf16 %v1030, %v1028
        %v1091 = vpack.c.bf16 %v1031, %v1029
        %v1092 = vpack.c.bf16 %v1034, %v1032
        %v1093 = vpack.c.bf16 %v1035, %v1033
        %v1094 = vpack.c.bf16 %v1038, %v1036
        %v1095 = vpack.c.bf16 %v1039, %v1037
        %v1096 = vpack.c.bf16 %v1042, %v1040
        %v1097 = vpack.c.bf16 %v1043, %v1041
        %v1098 = vpack.c.bf16 %v1046, %v1044
        %v1099 = vpack.c.bf16 %v1047, %v1045
        %v1100 = vpack.c.bf16 %v1050, %v1048
        %v1101 = vpack.c.bf16 %v1051, %v1049
        %v1102 = vpack.c.bf16 %v1054, %v1052
        %v1103 = vpack.c.bf16 %v1055, %v1053
        %v1104 = vpack.c.bf16 %v1058, %v1056
        %v1105 = vpack.c.bf16 %v1059, %v1057
        %v1106 = vpack.c.bf16 %v1062, %v1060
        %v1107 = vpack.c.bf16 %v1063, %v1061
        %v1108 = vpack.c.bf16 %v1066, %v1064
        %v1109 = vpack.c.bf16 %v1067, %v1065
        %v1110 = vpack.c.bf16 %v1070, %v1068
        %v1111 = vpack.c.bf16 %v1071, %v1069
        %v1112 = vpack.c.bf16 %v1074, %v1072
        %v1113 = vpack.c.bf16 %v1075, %v1073
        %v1114 = vpack.c.bf16 %v1078, %v1076
        %v1115 = vpack.c.bf16 %v1079, %v1077
        %v1116 = vpack.c.bf16 %v1082, %v1080
        %v1117 = vpack.c.bf16 %v1083, %v1081
        %v1118 = vpack.c.bf16 %v1086, %v1084
        %v1119 = vpack.c.bf16 %v1087, %v1085
        %v1120 = vld [vmem:[%s3] sm:$0xff]
        %v1121 = vld [vmem:[%s3 + $0x8] sm:$0xff]
        %v1122 = vld [vmem:[%s3 + $0x10] sm:$0xff]
        %v1123 = vld [vmem:[%s3 + $0x18] sm:$0xff]
        %v1124 = vld [vmem:[%s3 + $0x20] sm:$0xff]
        %v1125 = vld [vmem:[%s3 + $0x28] sm:$0xff]
        %v1126 = vld [vmem:[%s3 + $0x30] sm:$0xff]
        %v1127 = vld [vmem:[%s3 + $0x38] sm:$0xff]
        %v1128 = vld [vmem:[%s3 + $0x40] sm:$0xff]
        %v1129 = vld [vmem:[%s3 + $0x48] sm:$0xff]
        %v1130 = vld [vmem:[%s3 + $0x50] sm:$0xff]
        %v1131 = vld [vmem:[%s3 + $0x58] sm:$0xff]
        %v1132 = vld [vmem:[%s3 + $0x60] sm:$0xff]
        %v1133 = vld [vmem:[%s3 + $0x68] sm:$0xff]
        %v1134 = vld [vmem:[%s3 + $0x70] sm:$0xff]
        %v1135 = vld [vmem:[%s3 + $0x78] sm:$0xff]
        %v1136 = vld [vmem:[%s4] sm:$0xff]
        %v1137 = vld [vmem:[%s4 + $0x8] sm:$0xff]
        %v1138 = vld [vmem:[%s4 + $0x10] sm:$0xff]
        %v1139 = vld [vmem:[%s4 + $0x18] sm:$0xff]
        %v1140 = vld [vmem:[%s4 + $0x20] sm:$0xff]
        %v1141 = vld [vmem:[%s4 + $0x28] sm:$0xff]
        %v1142 = vld [vmem:[%s4 + $0x30] sm:$0xff]
        %v1143 = vld [vmem:[%s4 + $0x38] sm:$0xff]
        %v1144 = vld [vmem:[%s4 + $0x40] sm:$0xff]
        %v1145 = vld [vmem:[%s4 + $0x48] sm:$0xff]
        %v1146 = vld [vmem:[%s4 + $0x50] sm:$0xff]
        %v1147 = vld [vmem:[%s4 + $0x58] sm:$0xff]
        %v1148 = vld [vmem:[%s4 + $0x60] sm:$0xff]
        %v1149 = vld [vmem:[%s4 + $0x68] sm:$0xff]
        %v1150 = vld [vmem:[%s4 + $0x70] sm:$0xff]
        %v1151 = vld [vmem:[%s4 + $0x78] sm:$0xff]
        %1153 = vset.pattern.permute.xlu0 0
        %1154 = vperm.xlu0 %1153, %v1136
        %v1155 = vpop.permute.xlu0 %1154
        %1158 = vset.pattern.permute.xlu0 0
        %1159 = vperm.xlu0 %1158, %v1137
        %v1160 = vpop.permute.xlu0 %1159
        %1163 = vset.pattern.permute.xlu0 0
        %1164 = vperm.xlu0 %1163, %v1138
        %v1165 = vpop.permute.xlu0 %1164
        %1168 = vset.pattern.permute.xlu0 0
        %1169 = vperm.xlu0 %1168, %v1139
        %v1170 = vpop.permute.xlu0 %1169
        %1173 = vset.pattern.permute.xlu0 0
        %1174 = vperm.xlu0 %1173, %v1140
        %v1175 = vpop.permute.xlu0 %1174
        %1178 = vset.pattern.permute.xlu0 0
        %1179 = vperm.xlu0 %1178, %v1141
        %v1180 = vpop.permute.xlu0 %1179
        %1183 = vset.pattern.permute.xlu0 0
        %1184 = vperm.xlu0 %1183, %v1142
        %v1185 = vpop.permute.xlu0 %1184
        %1188 = vset.pattern.permute.xlu0 0
        %1189 = vperm.xlu0 %1188, %v1143
        %v1190 = vpop.permute.xlu0 %1189
        %1193 = vset.pattern.permute.xlu0 0
        %1194 = vperm.xlu0 %1193, %v1144
        %v1195 = vpop.permute.xlu0 %1194
        %1198 = vset.pattern.permute.xlu0 0
        %1199 = vperm.xlu0 %1198, %v1145
        %v1200 = vpop.permute.xlu0 %1199
        %1203 = vset.pattern.permute.xlu0 0
        %1204 = vperm.xlu0 %1203, %v1146
        %v1205 = vpop.permute.xlu0 %1204
        %1208 = vset.pattern.permute.xlu0 0
        %1209 = vperm.xlu0 %1208, %v1147
        %v1210 = vpop.permute.xlu0 %1209
        %1213 = vset.pattern.permute.xlu0 0
        %1214 = vperm.xlu0 %1213, %v1148
        %v1215 = vpop.permute.xlu0 %1214
        %1218 = vset.pattern.permute.xlu0 0
        %1219 = vperm.xlu0 %1218, %v1149
        %v1220 = vpop.permute.xlu0 %1219
        %1223 = vset.pattern.permute.xlu0 0
        %1224 = vperm.xlu0 %1223, %v1150
        %v1225 = vpop.permute.xlu0 %1224
        %1228 = vset.pattern.permute.xlu0 0
        %1229 = vperm.xlu0 %1228, %v1151
        %v1230 = vpop.permute.xlu0 %1229
        %v1248 = vunpack.c.l.b16 %v1120
        %v1249 = vunpack.c.h.b16 %v1120
        %v1250 = vunpack.c.l.b16 %v1121
        %v1251 = vunpack.c.h.b16 %v1121
        %v1252 = vunpack.c.l.b16 %v1122
        %v1253 = vunpack.c.h.b16 %v1122
        %v1254 = vunpack.c.l.b16 %v1123
        %v1255 = vunpack.c.h.b16 %v1123
        %v1256 = vunpack.c.l.b16 %v1124
        %v1257 = vunpack.c.h.b16 %v1124
        %v1258 = vunpack.c.l.b16 %v1125
        %v1259 = vunpack.c.h.b16 %v1125
        %v1260 = vunpack.c.l.b16 %v1126
        %v1261 = vunpack.c.h.b16 %v1126
        %v1262 = vunpack.c.l.b16 %v1127
        %v1263 = vunpack.c.h.b16 %v1127
        %v1264 = vunpack.c.l.b16 %v1128
        %v1265 = vunpack.c.h.b16 %v1128
        %v1266 = vunpack.c.l.b16 %v1129
        %v1267 = vunpack.c.h.b16 %v1129
        %v1268 = vunpack.c.l.b16 %v1130
        %v1269 = vunpack.c.h.b16 %v1130
        %v1270 = vunpack.c.l.b16 %v1131
        %v1271 = vunpack.c.h.b16 %v1131
        %v1272 = vunpack.c.l.b16 %v1132
        %v1273 = vunpack.c.h.b16 %v1132
        %v1274 = vunpack.c.l.b16 %v1133
        %v1275 = vunpack.c.h.b16 %v1133
        %v1276 = vunpack.c.l.b16 %v1134
        %v1277 = vunpack.c.h.b16 %v1134
        %v1278 = vunpack.c.l.b16 %v1135
        %v1279 = vunpack.c.h.b16 %v1135
        %v1280 = vpack.c.b16 %v1250, %v1248
        %v1281 = vpack.c.b16 %v1251, %v1249
        %v1282 = vpack.c.b16 %v1254, %v1252
        %v1283 = vpack.c.b16 %v1255, %v1253
        %v1284 = vpack.c.b16 %v1258, %v1256
        %v1285 = vpack.c.b16 %v1259, %v1257
        %v1286 = vpack.c.b16 %v1262, %v1260
        %v1287 = vpack.c.b16 %v1263, %v1261
        %v1288 = vpack.c.b16 %v1266, %v1264
        %v1289 = vpack.c.b16 %v1267, %v1265
        %v1290 = vpack.c.b16 %v1270, %v1268
        %v1291 = vpack.c.b16 %v1271, %v1269
        %v1292 = vpack.c.b16 %v1274, %v1272
        %v1293 = vpack.c.b16 %v1275, %v1273
        %v1294 = vpack.c.b16 %v1278, %v1276
        %v1295 = vpack.c.b16 %v1279, %v1277
        %1312 = vmatprep.subr.bf16.mxu0 %v1089
        %1313 = vmatpush1.bf16.msra.mxu0 %v1088
        %1314 = vmatprep.subr.bf16.mxu0 %v1091
        %1315 = vmatpush1.bf16.msra.mxu0 %v1090
        %1316 = vmatprep.subr.bf16.mxu0 %v1093
        %1317 = vmatpush1.bf16.msra.mxu0 %v1092
        %1318 = vmatprep.subr.bf16.mxu0 %v1095
        %1319 = vmatpush1.bf16.msra.mxu0 %v1094
        %1320 = vmatprep.subr.bf16.mxu0 %v1097
        %1321 = vmatpush1.bf16.msra.mxu0 %v1096
        %1322 = vmatprep.subr.bf16.mxu0 %v1099
        %1323 = vmatpush1.bf16.msra.mxu0 %v1098
        %1324 = vmatprep.subr.bf16.mxu0 %v1101
        %1325 = vmatpush1.bf16.msra.mxu0 %v1100
        %1326 = vmatprep.subr.bf16.mxu0 %v1103
        %1327 = vmatpush1.bf16.msra.mxu0 %v1102
        %1328 = vmatprep.subr.bf16.mxu0 %v1105
        %1329 = vmatpush1.bf16.msra.mxu0 %v1104
        %1330 = vmatprep.subr.bf16.mxu0 %v1107
        %1331 = vmatpush1.bf16.msra.mxu0 %v1106
        %1332 = vmatprep.subr.bf16.mxu0 %v1109
        %1333 = vmatpush1.bf16.msra.mxu0 %v1108
        %1334 = vmatprep.subr.bf16.mxu0 %v1111
        %1335 = vmatpush1.bf16.msra.mxu0 %v1110
        %1336 = vmatprep.subr.bf16.mxu0 %v1113
        %1337 = vmatpush1.bf16.msra.mxu0 %v1112
        %1338 = vmatprep.subr.bf16.mxu0 %v1115
        %1339 = vmatpush1.bf16.msra.mxu0 %v1114
        %1340 = vmatprep.subr.bf16.mxu0 %v1117
        %1341 = vmatpush1.bf16.msra.mxu0 %v1116
        %1342 = vmatprep.subr.bf16.mxu0 %v1119
        %1343 = vmatpush1.bf16.msra.mxu0 %v1118
        %1344 = vmatprep.mubr.bf16.mxu0 %v1281
        %1345 = vmatmul.mubr.bf16.gmra.mrb[0].mxu0 %v1280
        %v1346 = vpop.f32.mrb[0].mxu0
        %v1347 = vadd.f32 %v1155, %v1346
        %v1348 = vpop.f32.mrb[0].mxu0
        %v1349 = vadd.f32 %v1155, %v1348
        %v1350 = vpop.f32.mrb[0].mxu0
        %v1351 = vadd.f32 %v1160, %v1350
        %v1352 = vpop.f32.mrb[0].mxu0
        %v1353 = vadd.f32 %v1160, %v1352
        %1354 = vmatprep.mubr.bf16.mxu0 %v1283
        %1355 = vmatmul.mubr.bf16.gmra.mrb[0].mxu0 %v1282
        %v1356 = vpop.f32.mrb[0].mxu0
        %v1357 = vadd.f32 %v1165, %v1356
        %v1358 = vpop.f32.mrb[0].mxu0
        %v1359 = vadd.f32 %v1165, %v1358
        %v1360 = vpop.f32.mrb[0].mxu0
        %v1361 = vadd.f32 %v1170, %v1360
        %v1362 = vpop.f32.mrb[0].mxu0
        %v1363 = vadd.f32 %v1170, %v1362
        %1364 = vmatprep.mubr.bf16.mxu0 %v1285
        %1365 = vmatmul.mubr.bf16.gmra.mrb[0].mxu0 %v1284
        %v1366 = vpop.f32.mrb[0].mxu0
        %v1367 = vadd.f32 %v1175, %v1366
        %v1368 = vpop.f32.mrb[0].mxu0
        %v1369 = vadd.f32 %v1175, %v1368
        %v1370 = vpop.f32.mrb[0].mxu0
        %v1371 = vadd.f32 %v1180, %v1370
        %v1372 = vpop.f32.mrb[0].mxu0
        %v1373 = vadd.f32 %v1180, %v1372
        %1374 = vmatprep.mubr.bf16.mxu0 %v1287
        %1375 = vmatmul.mubr.bf16.gmra.mrb[0].mxu0 %v1286
        %v1376 = vpop.f32.mrb[0].mxu0
        %v1377 = vadd.f32 %v1185, %v1376
        %v1378 = vpop.f32.mrb[0].mxu0
        %v1379 = vadd.f32 %v1185, %v1378
        %v1380 = vpop.f32.mrb[0].mxu0
        %v1381 = vadd.f32 %v1190, %v1380
        %v1382 = vpop.f32.mrb[0].mxu0
        %v1383 = vadd.f32 %v1190, %v1382
        %1384 = vmatprep.mubr.bf16.mxu0 %v1289
        %1385 = vmatmul.mubr.bf16.gmra.mrb[0].mxu0 %v1288
        %v1386 = vpop.f32.mrb[0].mxu0
        %v1387 = vadd.f32 %v1195, %v1386
        %v1388 = vpop.f32.mrb[0].mxu0
        %v1389 = vadd.f32 %v1195, %v1388
        %v1390 = vpop.f32.mrb[0].mxu0
        %v1391 = vadd.f32 %v1200, %v1390
        %v1392 = vpop.f32.mrb[0].mxu0
        %v1393 = vadd.f32 %v1200, %v1392
        %1394 = vmatprep.mubr.bf16.mxu0 %v1291
        %1395 = vmatmul.mubr.bf16.gmra.mrb[0].mxu0 %v1290
        %v1396 = vpop.f32.mrb[0].mxu0
        %v1397 = vadd.f32 %v1205, %v1396
        %v1398 = vpop.f32.mrb[0].mxu0
        %v1399 = vadd.f32 %v1205, %v1398
        %v1400 = vpop.f32.mrb[0].mxu0
        %v1401 = vadd.f32 %v1210, %v1400
        %v1402 = vpop.f32.mrb[0].mxu0
        %v1403 = vadd.f32 %v1210, %v1402
        %1404 = vmatprep.mubr.bf16.mxu0 %v1293
        %1405 = vmatmul.mubr.bf16.gmra.mrb[0].mxu0 %v1292
        %v1406 = vpop.f32.mrb[0].mxu0
        %v1407 = vadd.f32 %v1215, %v1406
        %v1408 = vpop.f32.mrb[0].mxu0
        %v1409 = vadd.f32 %v1215, %v1408
        %v1410 = vpop.f32.mrb[0].mxu0
        %v1411 = vadd.f32 %v1220, %v1410
        %v1412 = vpop.f32.mrb[0].mxu0
        %v1413 = vadd.f32 %v1220, %v1412
        %1414 = vmatprep.mubr.bf16.mxu0 %v1295
        %1415 = vmatmul.mubr.bf16.gmra.mrb[0].mxu0 %v1294
        %v1416 = vpop.f32.mrb[0].mxu0
        %v1417 = vadd.f32 %v1225, %v1416
        %v1418 = vpop.f32.mrb[0].mxu0
        %v1419 = vadd.f32 %v1225, %v1418
        %v1420 = vpop.f32.mrb[0].mxu0
        %v1421 = vadd.f32 %v1230, %v1420
        %v1422 = vpop.f32.mrb[0].mxu0
        %v1423 = vadd.f32 %v1230, %v1422
        %1424 = vdwg.mxu0
        %v1425 = vmax.f32 %v1347, 0.0
        %v1426 = vmax.f32 %v1349, 0.0
        %v1427 = vmax.f32 %v1351, 0.0
        %v1428 = vmax.f32 %v1353, 0.0
        %v1429 = vmax.f32 %v1357, 0.0
        %v1430 = vmax.f32 %v1359, 0.0
        %v1431 = vmax.f32 %v1361, 0.0
        %v1432 = vmax.f32 %v1363, 0.0
        %v1433 = vmax.f32 %v1367, 0.0
        %v1434 = vmax.f32 %v1369, 0.0
        %v1435 = vmax.f32 %v1371, 0.0
        %v1436 = vmax.f32 %v1373, 0.0
        %v1437 = vmax.f32 %v1377, 0.0
        %v1438 = vmax.f32 %v1379, 0.0
        %v1439 = vmax.f32 %v1381, 0.0
        %v1440 = vmax.f32 %v1383, 0.0
        %v1441 = vmax.f32 %v1387, 0.0
        %v1442 = vmax.f32 %v1389, 0.0
        %v1443 = vmax.f32 %v1391, 0.0
        %v1444 = vmax.f32 %v1393, 0.0
        %v1445 = vmax.f32 %v1397, 0.0
        %v1446 = vmax.f32 %v1399, 0.0
        %v1447 = vmax.f32 %v1401, 0.0
        %v1448 = vmax.f32 %v1403, 0.0
        %v1449 = vmax.f32 %v1407, 0.0
        %v1450 = vmax.f32 %v1409, 0.0
        %v1451 = vmax.f32 %v1411, 0.0
        %v1452 = vmax.f32 %v1413, 0.0
        %v1453 = vmax.f32 %v1417, 0.0
        %v1454 = vmax.f32 %v1419, 0.0
        %v1455 = vmax.f32 %v1421, 0.0
        %v1456 = vmax.f32 %v1423, 0.0
        %v1457 = vpack.c.bf16 %v1427, %v1425
        %v1458 = vpack.c.bf16 %v1428, %v1426
        %v1459 = vpack.c.bf16 %v1431, %v1429
        %v1460 = vpack.c.bf16 %v1432, %v1430
        %v1461 = vpack.c.bf16 %v1435, %v1433
        %v1462 = vpack.c.bf16 %v1436, %v1434
        %v1463 = vpack.c.bf16 %v1439, %v1437
        %v1464 = vpack.c.bf16 %v1440, %v1438
        %v1465 = vpack.c.bf16 %v1443, %v1441
        %v1466 = vpack.c.bf16 %v1444, %v1442
        %v1467 = vpack.c.bf16 %v1447, %v1445
        %v1468 = vpack.c.bf16 %v1448, %v1446
        %v1469 = vpack.c.bf16 %v1451, %v1449
        %v1470 = vpack.c.bf16 %v1452, %v1450
        %v1471 = vpack.c.bf16 %v1455, %v1453
        %v1472 = vpack.c.bf16 %v1456, %v1454
        %v1473 = vld [vmem:[%s5] sm:$0xf]
        %v1474 = vld [vmem:[%s5 + $0x4] sm:$0xf]
        %v1475 = vld [vmem:[%s5 + $0x8] sm:$0xf]
        %v1476 = vld [vmem:[%s5 + $0xc] sm:$0xf]
        %v1477 = vld [vmem:[%s5 + $0x10] sm:$0xf]
        %v1478 = vld [vmem:[%s5 + $0x14] sm:$0xf]
        %v1479 = vld [vmem:[%s5 + $0x18] sm:$0xf]
        %v1480 = vld [vmem:[%s5 + $0x1c] sm:$0xf]
        %v1481 = vld [vmem:[%s6] sm:$0xff]
        %v1482 = vld [vmem:[%s6 + $0x8] sm:$0xff]
        %v1483 = vld [vmem:[%s6 + $0x10] sm:$0xff]
        %v1484 = vld [vmem:[%s6 + $0x18] sm:$0xff]
        %v1485 = vld [vmem:[%s6 + $0x20] sm:$0xff]
        %v1486 = vld [vmem:[%s6 + $0x28] sm:$0xff]
        %v1487 = vld [vmem:[%s6 + $0x30] sm:$0xff]
        %v1488 = vld [vmem:[%s6 + $0x38] sm:$0xff]
        %1490 = vset.pattern.permute.xlu0 0
        %1491 = vperm.xlu0 %1490, %v1481
        %v1492 = vpop.permute.xlu0 %1491
        %1495 = vset.pattern.permute.xlu0 0
        %1496 = vperm.xlu0 %1495, %v1482
        %v1497 = vpop.permute.xlu0 %1496
        %1500 = vset.pattern.permute.xlu0 0
        %1501 = vperm.xlu0 %1500, %v1483
        %v1502 = vpop.permute.xlu0 %1501
        %1505 = vset.pattern.permute.xlu0 0
        %1506 = vperm.xlu0 %1505, %v1484
        %v1507 = vpop.permute.xlu0 %1506
        %1510 = vset.pattern.permute.xlu0 0
        %1511 = vperm.xlu0 %1510, %v1485
        %v1512 = vpop.permute.xlu0 %1511
        %1515 = vset.pattern.permute.xlu0 0
        %1516 = vperm.xlu0 %1515, %v1486
        %v1517 = vpop.permute.xlu0 %1516
        %1520 = vset.pattern.permute.xlu0 0
        %1521 = vperm.xlu0 %1520, %v1487
        %v1522 = vpop.permute.xlu0 %1521
        %1525 = vset.pattern.permute.xlu0 0
        %1526 = vperm.xlu0 %1525, %v1488
        %v1527 = vpop.permute.xlu0 %1526
        %v1537 = vunpack.c.l.b16 %v1473
        %v1538 = vunpack.c.l.b16 %v1474
        %v1539 = vunpack.c.l.b16 %v1475
        %v1540 = vunpack.c.l.b16 %v1476
        %v1541 = vunpack.c.l.b16 %v1477
        %v1542 = vunpack.c.l.b16 %v1478
        %v1543 = vunpack.c.l.b16 %v1479
        %v1544 = vunpack.c.l.b16 %v1480
        %v1545 = vpack.c.b16 %v1538, %v1537
        %v1546 = vpack.c.b16 %v1540, %v1539
        %v1547 = vpack.c.b16 %v1542, %v1541
        %v1548 = vpack.c.b16 %v1544, %v1543
        %1553 = vmatprep.subr.bf16.mxu0 %v1458
        %1554 = vmatpush1.bf16.msra.mxu0 %v1457
        %1555 = vmatprep.subr.bf16.mxu0 %v1460
        %1556 = vmatpush1.bf16.msra.mxu0 %v1459
        %1557 = vmatprep.subr.bf16.mxu0 %v1462
        %1558 = vmatpush1.bf16.msra.mxu0 %v1461
        %1559 = vmatprep.subr.bf16.mxu0 %v1464
        %1560 = vmatpush1.bf16.msra.mxu0 %v1463
        %1561 = vmatprep.subr.bf16.mxu0 %v1466
        %1562 = vmatpush1.bf16.msra.mxu0 %v1465
        %1563 = vmatprep.subr.bf16.mxu0 %v1468
        %1564 = vmatpush1.bf16.msra.mxu0 %v1467
        %1565 = vmatprep.subr.bf16.mxu0 %v1470
        %1566 = vmatpush1.bf16.msra.mxu0 %v1469
        %1567 = vmatprep.subr.bf16.mxu0 %v1472
        %1568 = vmatpush1.bf16.msra.mxu0 %v1471
        %1569 = vmatprep.subr.bf16.mxu0 0
        %1570 = vmatpush1.bf16.msra.mxu0 0
        %1571 = vmatprep.subr.bf16.mxu0 0
        %1572 = vmatpush1.bf16.msra.mxu0 0
        %1573 = vmatprep.subr.bf16.mxu0 0
        %1574 = vmatpush1.bf16.msra.mxu0 0
        %1575 = vmatprep.subr.bf16.mxu0 0
        %1576 = vmatpush1.bf16.msra.mxu0 0
        %1577 = vmatprep.subr.bf16.mxu0 0
        %1578 = vmatpush1.bf16.msra.mxu0 0
        %1579 = vmatprep.subr.bf16.mxu0 0
        %1580 = vmatpush1.bf16.msra.mxu0 0
        %1581 = vmatprep.subr.bf16.mxu0 0
        %1582 = vmatpush1.bf16.msra.mxu0 0
        %1583 = vmatprep.subr.bf16.mxu0 0
        %1584 = vmatpush1.bf16.msra.mxu0 0
        %1585 = vmatprep.mubr.bf16.mxu0 0
        %1586 = vmatmul.mubr.bf16.gmra.mrb[0].mxu0 %v1545
        %v1587 = vpop.f32.mrb[0].mxu0
        %v1588 = vadd.f32 %v1492, %v1587
        %v1589 = vpop.f32.mrb[0].mxu0
        %v1590 = vadd.f32 %v1492, %v1589
        %v1591 = vpop.f32.mrb[0].mxu0
        %v1592 = vadd.f32 %v1497, %v1591
        %v1593 = vpop.f32.mrb[0].mxu0
        %v1594 = vadd.f32 %v1497, %v1593
        %1595 = vmatprep.mubr.bf16.mxu0 0
        %1596 = vmatmul.mubr.bf16.gmra.mrb[0].mxu0 %v1546
        %v1597 = vpop.f32.mrb[0].mxu0
        %v1598 = vadd.f32 %v1502, %v1597
        %v1599 = vpop.f32.mrb[0].mxu0
        %v1600 = vadd.f32 %v1502, %v1599
        %v1601 = vpop.f32.mrb[0].mxu0
        %v1602 = vadd.f32 %v1507, %v1601
        %v1603 = vpop.f32.mrb[0].mxu0
        %v1604 = vadd.f32 %v1507, %v1603
        %1605 = vmatprep.mubr.bf16.mxu0 0
        %1606 = vmatmul.mubr.bf16.gmra.mrb[0].mxu0 %v1547
        %v1607 = vpop.f32.mrb[0].mxu0
        %v1608 = vadd.f32 %v1512, %v1607
        %v1609 = vpop.f32.mrb[0].mxu0
        %v1610 = vadd.f32 %v1512, %v1609
        %v1611 = vpop.f32.mrb[0].mxu0
        %v1612 = vadd.f32 %v1517, %v1611
        %v1613 = vpop.f32.mrb[0].mxu0
        %v1614 = vadd.f32 %v1517, %v1613
        %1615 = vmatprep.mubr.bf16.mxu0 0
        %1616 = vmatmul.mubr.bf16.gmra.mrb[0].mxu0 %v1548
        %v1617 = vpop.f32.mrb[0].mxu0
        %v1618 = vadd.f32 %v1522, %v1617
        %v1619 = vpop.f32.mrb[0].mxu0
        %v1620 = vadd.f32 %v1522, %v1619
        %v1621 = vpop.f32.mrb[0].mxu0
        %v1622 = vadd.f32 %v1527, %v1621
        %v1623 = vpop.f32.mrb[0].mxu0
        %v1624 = vadd.f32 %v1527, %v1623
        %1625 = vdwg.mxu0
        %v1626 = vmax.f32 %v1588, 0.0
        %v1627 = vmax.f32 %v1590, 0.0
        %v1628 = vmax.f32 %v1592, 0.0
        %v1629 = vmax.f32 %v1594, 0.0
        %v1630 = vmax.f32 %v1598, 0.0
        %v1631 = vmax.f32 %v1600, 0.0
        %v1632 = vmax.f32 %v1602, 0.0
        %v1633 = vmax.f32 %v1604, 0.0
        %v1634 = vmax.f32 %v1608, 0.0
        %v1635 = vmax.f32 %v1610, 0.0
        %v1636 = vmax.f32 %v1612, 0.0
        %v1637 = vmax.f32 %v1614, 0.0
        %v1638 = vmax.f32 %v1618, 0.0
        %v1639 = vmax.f32 %v1620, 0.0
        %v1640 = vmax.f32 %v1622, 0.0
        %v1641 = vmax.f32 %v1624, 0.0
        %v1642 = vpack.c.bf16 %v1628, %v1626
        %v1643 = vpack.c.bf16 %v1629, %v1627
        %v1644 = vpack.c.bf16 %v1632, %v1630
        %v1645 = vpack.c.bf16 %v1633, %v1631
        %v1646 = vpack.c.bf16 %v1636, %v1634
        %v1647 = vpack.c.bf16 %v1637, %v1635
        %v1648 = vpack.c.bf16 %v1640, %v1638
        %v1649 = vpack.c.bf16 %v1641, %v1639
        %v1650 = vld [vmem:[%s7] sm:$0xf]
        %v1651 = vld [vmem:[%s7 + $0x4] sm:$0xf]
        %v1652 = vld [vmem:[%s7 + $0x8] sm:$0xf]
        %v1653 = vld [vmem:[%s7 + $0xc] sm:$0xf]
        %v1654 = vld [vmem:[%s8] sm:$0xff]
        %v1655 = vld [vmem:[%s8 + $0x8] sm:$0xff]
        %v1656 = vld [vmem:[%s8 + $0x10] sm:$0xff]
        %v1657 = vld [vmem:[%s8 + $0x18] sm:$0xff]
        %1659 = vset.pattern.permute.xlu0 0
        %1660 = vperm.xlu0 %1659, %v1654
        %v1661 = vpop.permute.xlu0 %1660
        %1664 = vset.pattern.permute.xlu0 0
        %1665 = vperm.xlu0 %1664, %v1655
        %v1666 = vpop.permute.xlu0 %1665
        %1669 = vset.pattern.permute.xlu0 0
        %1670 = vperm.xlu0 %1669, %v1656
        %v1671 = vpop.permute.xlu0 %1670
        %1674 = vset.pattern.permute.xlu0 0
        %1675 = vperm.xlu0 %1674, %v1657
        %v1676 = vpop.permute.xlu0 %1675
        %v1682 = vunpack.c.l.b16 %v1650
        %v1683 = vunpack.c.l.b16 %v1651
        %v1684 = vunpack.c.l.b16 %v1652
        %v1685 = vunpack.c.l.b16 %v1653
        %v1686 = vpack.c.b16 %v1683, %v1682
        %v1687 = vpack.c.b16 %v1685, %v1684
        %vm1688 = vcmask 523264
        %v1690 = vsel %vm1688, %v1686, 0
        %v1693 = vsel %vm1688, %v1687, 0
        %1695 = vmatprep.subr.bf16.mxu0 %v1643
        %1696 = vmatpush1.bf16.msra.mxu0 %v1642
        %1697 = vmatprep.subr.bf16.mxu0 %v1645
        %1698 = vmatpush1.bf16.msra.mxu0 %v1644
        %1699 = vmatprep.subr.bf16.mxu0 %v1647
        %1700 = vmatpush1.bf16.msra.mxu0 %v1646
        %1701 = vmatprep.subr.bf16.mxu0 %v1649
        %1702 = vmatpush1.bf16.msra.mxu0 %v1648
        %1703 = vmatprep.subr.bf16.mxu0 0
        %1704 = vmatpush1.bf16.msra.mxu0 0
        %1705 = vmatprep.subr.bf16.mxu0 0
        %1706 = vmatpush1.bf16.msra.mxu0 0
        %1707 = vmatprep.subr.bf16.mxu0 0
        %1708 = vmatpush1.bf16.msra.mxu0 0
        %1709 = vmatprep.subr.bf16.mxu0 0
        %1710 = vmatpush1.bf16.msra.mxu0 0
        %1711 = vmatprep.subr.bf16.mxu0 0
        %1712 = vmatpush1.bf16.msra.mxu0 0
        %1713 = vmatprep.subr.bf16.mxu0 0
        %1714 = vmatpush1.bf16.msra.mxu0 0
        %1715 = vmatprep.subr.bf16.mxu0 0
        %1716 = vmatpush1.bf16.msra.mxu0 0
        %1717 = vmatprep.subr.bf16.mxu0 0
        %1718 = vmatpush1.bf16.msra.mxu0 0
        %1719 = vmatprep.subr.bf16.mxu0 0
        %1720 = vmatpush1.bf16.msra.mxu0 0
        %1721 = vmatprep.subr.bf16.mxu0 0
        %1722 = vmatpush1.bf16.msra.mxu0 0
        %1723 = vmatprep.subr.bf16.mxu0 0
        %1724 = vmatpush1.bf16.msra.mxu0 0
        %1725 = vmatprep.subr.bf16.mxu0 0
        %1726 = vmatpush1.bf16.msra.mxu0 0
        %1727 = vmatprep.mubr.bf16.mxu0 0
        %1728 = vmatmul.mubr.bf16.gmra.mrb[0].mxu0 %v1690
        %v1729 = vpop.f32.mrb[0].mxu0
        %v1730 = vadd.f32 %v1661, %v1729
        %v1731 = vpop.f32.mrb[0].mxu0
        %v1732 = vadd.f32 %v1661, %v1731
        %v1733 = vpop.f32.mrb[0].mxu0
        %v1734 = vadd.f32 %v1666, %v1733
        %v1735 = vpop.f32.mrb[0].mxu0
        %v1736 = vadd.f32 %v1666, %v1735
        %1737 = vmatprep.mubr.bf16.mxu0 0
        %1738 = vmatmul.mubr.bf16.gmra.mrb[0].mxu0 %v1693
        %v1739 = vpop.f32.mrb[0].mxu0
        %v1740 = vadd.f32 %v1671, %v1739
        %v1741 = vpop.f32.mrb[0].mxu0
        %v1742 = vadd.f32 %v1671, %v1741
        %v1743 = vpop.f32.mrb[0].mxu0
        %v1744 = vadd.f32 %v1676, %v1743
        %v1745 = vpop.f32.mrb[0].mxu0
        %v1746 = vadd.f32 %v1676, %v1745
        %1747 = vdwg.mxu0
        %v1748 = vmax.f32 %v1730, 0.0
        %v1749 = vmax.f32 %v1732, 0.0
        %v1750 = vmax.f32 %v1734, 0.0
        %v1751 = vmax.f32 %v1736, 0.0
        %v1752 = vmax.f32 %v1740, 0.0
        %v1753 = vmax.f32 %v1742, 0.0
        %v1754 = vmax.f32 %v1744, 0.0
        %v1755 = vmax.f32 %v1746, 0.0
        %v1756 = vpack.c.bf16 %v1750, %v1748
        %v1757 = vpack.c.bf16 %v1751, %v1749
        %v1758 = vpack.c.bf16 %v1754, %v1752
        %v1759 = vpack.c.bf16 %v1755, %v1753
        %v1760 = vld [vmem:[%s9] sm:$0x1]
        %v1761 = vld [vmem:[#allocation2] sm:$0x1]
        %1763 = vset.pattern.permute.xlu0 0
        %1764 = vperm.xlu0 %1763, %v1761
        %v1765 = vpop.permute.xlu0 %1764
        %v1767 = vlaneseq
        %v1768 = vshrl.u32 %v1767, 7
        %v1769 = vsub.s32 0, %v1768
        %v1770 = vrot.slane %v1765, %v1769
        %vm1771 = vcmask 261120
        %v1773 = vsel %vm1771, %v1760, 0
        %1775 = vmatprep.subr.bf16.mxu0 %v1757
        %1776 = vmatpush1.bf16.msra.mxu0 %v1756
        %1777 = vmatprep.subr.bf16.mxu0 %v1759
        %1778 = vmatpush1.bf16.msra.mxu0 %v1758
        %1779 = vmatprep.subr.bf16.mxu0 0
        %1780 = vmatpush1.bf16.msra.mxu0 0
        %1781 = vmatprep.subr.bf16.mxu0 0
        %1782 = vmatpush1.bf16.msra.mxu0 0
        %1783 = vmatprep.subr.bf16.mxu0 0
        %1784 = vmatpush1.bf16.msra.mxu0 0
        %1785 = vmatprep.subr.bf16.mxu0 0
        %1786 = vmatpush1.bf16.msra.mxu0 0
        %1787 = vmatprep.subr.bf16.mxu0 0
        %1788 = vmatpush1.bf16.msra.mxu0 0
        %1789 = vmatprep.subr.bf16.mxu0 0
        %1790 = vmatpush1.bf16.msra.mxu0 0
        %1791 = vmatprep.subr.bf16.mxu0 0
        %1792 = vmatpush1.bf16.msra.mxu0 0
        %1793 = vmatprep.subr.bf16.mxu0 0
        %1794 = vmatpush1.bf16.msra.mxu0 0
        %1795 = vmatprep.subr.bf16.mxu0 0
        %1796 = vmatpush1.bf16.msra.mxu0 0
        %1797 = vmatprep.subr.bf16.mxu0 0
        %1798 = vmatpush1.bf16.msra.mxu0 0
        %1799 = vmatprep.subr.bf16.mxu0 0
        %1800 = vmatpush1.bf16.msra.mxu0 0
        %1801 = vmatprep.subr.bf16.mxu0 0
        %1802 = vmatpush1.bf16.msra.mxu0 0
        %1803 = vmatprep.subr.bf16.mxu0 0
        %1804 = vmatpush1.bf16.msra.mxu0 0
        %1805 = vmatprep.subr.bf16.mxu0 0
        %1806 = vmatpush1.bf16.msra.mxu0 0
        %1807 = vmatprep.mubr.bf16.mxu0 0
        %1808 = vmatmul.mubr.bf16.gmra.mrb[0].mxu0 %v1773
        %v1809 = vpop.f32.mrb[0].mxu0
        %v1810 = vadd.f32 %v1770, %v1809
        %v1811 = vpop.f32.mrb[0].mxu0
        %v1812 = vadd.f32 %v1770, %v1811
        %v1813 = vpop.f32.mrb[0].mxu0
        %v1814 = vpop.f32.mrb[0].mxu0
        %1815 = vdwg.mxu0
        %v1818 = vcombine.low %v1810, %v1812
        %v1820 = vunpack.c.l.s4 1966171168
        %v1821 = vunpack.c.0.s8 %v1820
        %v1822 = vlaneseq
        %v1823 = vshrl.u32 %v1822, 7
        %v1824 = vsub.s32 %v1821, %v1823
        %v1825 = vrot.slane %v1818, %v1824
        %v1827 = vunpack.c.l.s4 1966171168
        %v1828 = vunpack.c.0.s8 %v1827
        %v1829 = vlaneseq
        %v1830 = vshrl.u32 %v1829, 7
        %v1831 = vsub.s32 %v1828, %v1830
        %v1832 = vrot.slane %v1825, %v1831
        %v1834 = vlaneseq
        %vm1835 = vcmp.ge.s32.totalorder %v1834, 0
        %vm1836 = vcmp.lt.s32.totalorder %v1834, 256
        %vm1837 = vmand %vm1835, %vm1836
        %1838 = vst.msk [vmem:[%s437] sm:$0x3] %vm1837, %v1832
        %s1839 = sand.u32 %s271, 1
        %s1840 = scalar_lea.sflag [#allocation5], %s1839
        %s1841 = sand.u32 %s271, 1
        %s1842 = smul.addr %s1841, 2
        %s1843 = scalar_lea.vmem [#allocation4], %s1842
        // Predicated region
        $region103: #{tpu_custom_call.1} parent=97 // pred_check
          %p1844 = pneg %p281
        $region104: #{tpu_custom_call.1} parent=97 // pred_check_branch
          %1846 = sbr.rel (%p1844) target = $region106
        $region105: #{tpu_custom_call.1} parent=97 // pred_region
          %s1847 = smul.u32 2, %s27
          %s1849 = ssub.s32 32, 32
          %1850 = vsyncadd %s1840, %s1849
          %s1851 = smul.addr %s1847, 16
          %s1852 = scalar_lea.hbm %s11, %s1851
          %s1854 = sshll.u32 %s1843, 4
          %s1855 = int_to_ptr.vmem [resolvable:$true] %s1854
          %1857 = dma.vmem_to_hbm [thread:$0]  %s1855, 32, %s1852, %s1840
        $region106: #{tpu_custom_call.1} parent=97 // pred_fallthru
          _
      $region98: #{tpu_custom_call.1} parent=5 // pred_fallthru
        _
      %p1858 = scmp.le.s32.totalorder 2, %s22
      // Predicated region
      $region107: #{tpu_custom_call.1} parent=5 // pred_check
        %p1859 = pneg %p1858
      $region108: #{tpu_custom_call.1} parent=5 // pred_check_branch
        %1861 = sbr.rel (%p1859) target = $region110
      $region109: #{tpu_custom_call.1} parent=5 // pred_region
        %s1862 = ssub.s32 %s22, 2
        // Predicated region
        $region111: #{tpu_custom_call.1} parent=109 // pred_check
          %p1863 = pneg %p287
        $region112: #{tpu_custom_call.1} parent=109 // pred_check_branch
          %1865 = sbr.rel (%p1863) target = $region114
        $region113: #{tpu_custom_call.1} parent=109 // pred_region
          %s1866 = sand.u32 %s272, 1
          %s1867 = scalar_lea.sflag [#allocation5], %s1866
          %s1868 = sand.u32 %s272, 1
          %s1869 = smul.addr %s1868, 2
          %s1870 = scalar_lea.vmem [#allocation4], %s1869
          %1871 = dma.done %s1867, 32
        $region114: #{tpu_custom_call.1} parent=109 // pred_fallthru
          _
      $region110: #{tpu_custom_call.1} parent=5 // pred_fallthru
        _
    $region6: #{tpu_custom_call.1} parent=1 // loop_footer
      %s26 = sadd.s32 1, %s22
    $region7: #{tpu_custom_call.1} parent=1 // loop_footer_branch
      %21 = sbr.rel target = $region3
    $region8: #{tpu_custom_call.1} parent=1 // loop_exit
      _
    %1872 = vsyncpa [#allocation5], 1
    %s1873 = scalar_lea.sflag [#allocation5], 1
    %1874 = vsyncpa %s1873, 1

</llo_original>
